<compile_context>
chip_gen: v7x
topology: tpu7x:2x2x1
jax: 0.10.0
libtpu: 0.0.40
codegen_flags: <defaults>
</compile_context>

<pallas_src>
import math
import functools

import jax
import jax.numpy as jnp
from jax.experimental import pallas as pl
from jax.experimental.pallas import tpu as pltpu


# -----------------------------------------------------------------------------
# helpers
# -----------------------------------------------------------------------------
def _round_up(a, b):
    return (a + b - 1) // b * b


def _vmem_budget_bytes():
    """~75% of per-core VMEM.  Fallback 64 MiB -> budget 48 MiB (safe on v7x)."""
    try:
        cap = int(pltpu.get_tpu_info().vmem_capacity_bytes)
    except Exception:
        cap = 64 * 1024 * 1024
    return int(cap) * 3 // 4


_HAS_BUFFERED = hasattr(pl, "Buffered")


def _weight_spec(shape):
    """Weight BlockSpec: constant index_map; single-buffered (DMA'd once)."""
    idx = lambda i, _shape=shape: (0,) * len(_shape)
    if _HAS_BUFFERED:
        try:
            return pl.BlockSpec(shape, idx, pipeline_mode=pl.Buffered(1))
        except TypeError:
            pass
    return pl.BlockSpec(shape, idx)


def _weight_buf_factor():
    return 1 if _HAS_BUFFERED else 2


def _compiler_params(budget, semantics):
    return pltpu.CompilerParams(dimension_semantics=semantics,
                                vmem_limit_bytes=int(budget))


def _res_apply(x, w13, b13, w2, b2, hid_pad):
    """ResBlock with w1|w3 packed column-wise; the w1 (relu) half is zero-padded
    to a 128-lane boundary so both slices below are lane-aligned sub-views."""
    hs = jnp.dot(x.astype(w13.dtype), w13,
                 preferred_element_type=jnp.float32) + b13.astype(jnp.float32)
    h = jnp.maximum(hs[:, :hid_pad], 0.0)
    skip = hs[:, hid_pad:]
    out = jnp.dot(h.astype(w2.dtype), w2,
                  preferred_element_type=jnp.float32) + b2.astype(jnp.float32)
    return out + skip


# -----------------------------------------------------------------------------
# Pallas kernels
# -----------------------------------------------------------------------------
def _encoder_stack_kernel(
    x_ref,
    fe_w13, fe_b13, fe_w2, fe_b2,
    e1_w13x, e1_w13f, e1_b13, e1_w2, e1_b2,
    es_w13, es_b13, es_w2, es_b2,
    ds_w13, ds_b13, ds_w2, ds_b2,
    dl_w13, dl_b13, dl_w2, dl_b2,
    dec_ref,
    *, hid_pad, fe_dim, n_enc_shared, n_dec_shared,
):
    x = x_ref[...]                                               # (tm, d_model)
    # feature = feature_encoder(x)
    feature = _res_apply(x, fe_w13[...], fe_b13[...], fe_w2[...], fe_b2[...],
                         hid_pad)                                # (tm, fe_dim) f32
    # hidden = encoder_first(concat([x, feature])): concat removed via row-split
    # weights; the fe_dim(=2)-row half becomes VPU broadcast-FMAs (no K=2 MXU pass).
    hs = jnp.dot(x.astype(e1_w13x.dtype), e1_w13x[...],
                 preferred_element_type=jnp.float32)
    w13f = e1_w13f[...].astype(jnp.float32)
    for j in range(fe_dim):
        hs = hs + feature[:, j:j + 1] * w13f[j:j + 1, :]
    hs = hs + e1_b13[...].astype(jnp.float32)
    h = jnp.maximum(hs[:, :hid_pad], 0.0)
    hidden = (jnp.dot(h.astype(e1_w2.dtype), e1_w2[...],
                      preferred_element_type=jnp.float32)
              + e1_b2[...].astype(jnp.float32) + hs[:, hid_pad:])
    # Shared encoder / decoder layers: the PyTorch Sequential repeats ONE module
    # instance, so the same packed weights are reused; ref reads hoisted out of
    # the loops (JAX does not CSE them).
    # TODO(synk): switch to lax.fori_loop(..., unroll=True) if e/d_layers grow >3.
    if n_enc_shared:
        es = (es_w13[...], es_b13[...], es_w2[...], es_b2[...])
        for _ in range(n_enc_shared):
            hidden = _res_apply(hidden, *es, hid_pad)
    if n_dec_shared:
        ds = (ds_w13[...], ds_b13[...], ds_w2[...], ds_b2[...])
        for _ in range(n_dec_shared):
            hidden = _res_apply(hidden, *ds, hid_pad)
    decoded = _res_apply(hidden, dl_w13[...], dl_b13[...], dl_w2[...],
                         dl_b2[...], hid_pad)
    dec_ref[...] = decoded.astype(dec_ref.dtype)


def _temporal_head_kernel(
    x_ref, dec_ref,
    fe_w13, fe_b13, fe_w2, fe_b2,
    td_w13f, td_w13d, td_b13, td_w2, td_b2,
    rp_w, rp_b,
    o_ref,
    *, hid_pad_fe, hid_pad_td, fe_dim, bt, seq_len,
):
    x = x_ref[...]        # (bt*L, d_model) rows for `bt` batch elements
    dec = dec_ref[...]    # (bt*L, d_model)
    # Recompute the tiny feature encoding in-register (cheaper than an HBM
    # round trip of a 2-lane array).
    feature = _res_apply(x, fe_w13[...], fe_b13[...], fe_w2[...], fe_b2[...],
                         hid_pad_fe)
    # temporal decoder on concat([feature, decoded]); fe_dim(=2) rows become
    # broadcast-FMAs, the d_model rows stay a single MXU matmul.
    hs = jnp.dot(dec.astype(td_w13d.dtype), td_w13d[...],
                 preferred_element_type=jnp.float32)
    w13f = td_w13f[...].astype(jnp.float32)
    for j in range(fe_dim):
        hs = hs + feature[:, j:j + 1] * w13f[j:j + 1, :]
    hs = hs + td_b13[...].astype(jnp.float32)
    h = jnp.maximum(hs[:, :hid_pad_td], 0.0)
    dec_col = (jnp.dot(h.astype(td_w2.dtype), td_w2[...],
                       preferred_element_type=jnp.float32)
               + td_b2[...].astype(jnp.float32) + hs[:, hid_pad_td:])  # (bt*L, 1)
    # Fused residual projection as a real MXU matmul: (bt, L) @ (L, pred_len),
    # producing a sublane/lane-dense (bt, pred_len) output slab.
    dec_bl = dec_col.reshape(bt, seq_len)
    out = (jnp.dot(dec_bl, rp_w[...].astype(jnp.float32),
                   preferred_element_type=jnp.float32)
           + rp_b[...].astype(jnp.float32))                            # (bt, P)
    o_ref[...] = out.astype(o_ref.dtype)


# -----------------------------------------------------------------------------
# pallas_call wrappers
# -----------------------------------------------------------------------------
def encoder_stack(x2d, kp, cfg):
    """x2d: (rows, d_model) -> decoded (rows, c_out*pred_len). Row-parallel."""
    M, D = x2d.shape
    CP = cfg["c_out"] * cfg["pred_len"]
    itemsize = jnp.dtype(x2d.dtype).itemsize
    weights = (tuple(kp["fe"]) + tuple(kp["enc_first"]) + tuple(kp["enc_shared"])
               + tuple(kp["dec_shared"]) + tuple(kp["dec_last"]))
    hid_pad = kp["enc_shared"][2].shape[0]          # rows of padded w2
    fe_dim = kp["enc_first"][1].shape[0]            # rows of the feature-side split

    # ---- VMEM budget & row-tile sizing (dtype- and generation-aware) ----
    budget = _vmem_budget_bytes()
    w_bytes = _weight_buf_factor() * sum(
        int(w.size) * jnp.dtype(w.dtype).itemsize for w in weights)
    # double-buffered in/out blocks + f32 intermediates (hs, h, result)
    per_row = (2 * (D + CP) * itemsize
               + (D + 2 * hid_pad + 2 * max(D, CP, fe_dim)) * 4)
    per_row = per_row * 3 // 2                      # headroom for relayout temps
    align = {4: 8, 2: 16, 1: 32}.get(itemsize, 8)   # sublane packing per dtype
    max_tile = 1024 if budget >= (80 << 20) else 512  # 128-MiB parts vs v7x
    avail = max(budget - w_bytes - (4 << 20), per_row * align)
    tm = max(align, min(max_tile, avail // per_row // align * align))
    Mp_min = _round_up(M, align)
    tm = min(tm, Mp_min)
    if tm >= Mp_min and Mp_min >= 512:
        tm = _round_up((Mp_min + 1) // 2, align)    # >=2 grid steps (v7x megacore)

    Mp = _round_up(M, tm)
    if Mp != M:
        x2d = jnp.pad(x2d, ((0, Mp - M), (0, 0)))

    kernel = functools.partial(
        _encoder_stack_kernel, hid_pad=hid_pad, fe_dim=fe_dim,
        n_enc_shared=cfg["e_layers"] - 1, n_dec_shared=cfg["d_layers"] - 1)
    out = pl.pallas_call(
        kernel,
        out_shape=jax.ShapeDtypeStruct((Mp, CP), x2d.dtype),
        grid=(Mp // tm,),
        in_specs=[pl.BlockSpec((tm, D), lambda i: (i, 0))]
                 + [_weight_spec(w.shape) for w in weights],
        out_specs=pl.BlockSpec((tm, CP), lambda i: (i, 0)),
        compiler_params=_compiler_params(budget, ("parallel",)),
    )(x2d, *weights)
    return out[:M]


def temporal_head(x2d, dec2d, kp, cfg, B):
    """x2d, dec2d: (B*seq_len, d_model) -> (B, pred_len)."""
    L, P = cfg["seq_len"], cfg["pred_len"]
    rows, D = x2d.shape
    assert rows == B * L
    itemsize = jnp.dtype(x2d.dtype).itemsize
    weights = tuple(kp["fe"]) + tuple(kp["temporal"]) + tuple(kp["residual_proj"])
    hid_pad_fe = kp["fe"][2].shape[0]
    hid_pad_td = kp["temporal"][3].shape[0]
    fe_dim = kp["temporal"][0].shape[0]

    budget = _vmem_budget_bytes()
    w_bytes = _weight_buf_factor() * sum(
        int(w.size) * jnp.dtype(w.dtype).itemsize for w in weights)
    per_elem = (L * (4 * D * itemsize
                     + (2 * hid_pad_fe + 2 * hid_pad_td + 2 * D + 4 * fe_dim + 8) * 4)
                + 2 * P * itemsize + (L + P) * 4)
    per_elem = per_elem * 3 // 2
    avail = max(budget - w_bytes - (4 << 20), per_elem)
    bt = min(B, 32, max(1, int(avail // per_elem)))
    if bt < B:                        # multi-step grid: keep block dims 8-aligned
        bt = max(8, bt // 8 * 8)
    B_pad = _round_up(B, bt)

    if B_pad != B:
        pad = (B_pad - B) * L
        x2d = jnp.pad(x2d, ((0, pad), (0, 0)))
        dec2d = jnp.pad(dec2d, ((0, pad), (0, 0)))

    kernel = functools.partial(
        _temporal_head_kernel, hid_pad_fe=hid_pad_fe, hid_pad_td=hid_pad_td,
        fe_dim=fe_dim, bt=bt, seq_len=L)
    out = pl.pallas_call(
        kernel,
        out_shape=jax.ShapeDtypeStruct((B_pad, P), x2d.dtype),
        grid=(B_pad // bt,),
        in_specs=[pl.BlockSpec((bt * L, D), lambda i: (i, 0)),
                  pl.BlockSpec((bt * L, D), lambda i: (i, 0))]
                 + [_weight_spec(w.shape) for w in weights],
        out_specs=pl.BlockSpec((bt, P), lambda i: (i, 0)),
        compiler_params=_compiler_params(budget, ("parallel",)),
    )(x2d, dec2d, *weights)
    return out[:B]


# -----------------------------------------------------------------------------
# Parameter construction (PyTorch-Linear-shaped, pre-transposed) + packing
# -----------------------------------------------------------------------------
def init_linear_params(key, in_dim, out_dim):
    k1, k2 = jax.random.split(key)
    bound = 1.0 / math.sqrt(in_dim)
    w = jax.random.uniform(k1, (in_dim, out_dim), jnp.float32, -bound, bound)
    b = jax.random.uniform(k2, (1, out_dim), jnp.float32, -bound, bound)
    return w, b


def init_resblock_params(key, in_dim, hid_dim, out_dim):
    k1, k2, k3 = jax.random.split(key, 3)
    w1, b1 = init_linear_params(k1, in_dim, hid_dim)
    w2, b2 = init_linear_params(k2, hid_dim, out_dim)
    w3, b3 = init_linear_params(k3, in_dim, out_dim)
    return (w1, b1, w2, b2, w3, b3)


def init_tide_params(key, cfg, feature_encode_dim=2):
    d = cfg["d_model"]
    fe = feature_encode_dim
    keys = jax.random.split(key, 7)
    return {
        "feature_encoder": init_resblock_params(keys[0], d, d, fe),
        "encoder_first": init_resblock_params(keys[1], d + fe, d, d),
        "encoder_shared": init_resblock_params(keys[2], d, d, d),   # reused e_layers-1 times
        "decoder_shared": init_resblock_params(keys[3], d, d, d),   # reused d_layers-1 times
        "decoder_last": init_resblock_params(keys[4], d, d, cfg["c_out"] * cfg["pred_len"]),
        "temporal_decoder": init_resblock_params(keys[5], d + fe, 4 * d, 1),
        "residual_proj": init_linear_params(keys[6], cfg["seq_len"], cfg["pred_len"]),
    }


def prepare_kernel_params(params, cfg, feature_encode_dim=2, dtype=jnp.float32):
    """Pack ResBlock weights for the kernels:
       * w1|w3 packed column-wise, the w1 (relu) half zero-padded to a 128-lane
         boundary (and w2 rows padded to match) so relu/skip slices are aligned.
       * concat-input blocks pre-split row-wise.
       dtype=jnp.bfloat16 halves HBM/VMEM traffic (f32 accumulation kept via
       preferred_element_type inside the kernels)."""

    def pack(p):
        w1, b1, w2, b2, w3, b3 = p
        hid = w1.shape[1]
        hid_pad = _round_up(hid, 128)
        w1p = jnp.pad(w1, ((0, 0), (0, hid_pad - hid)))
        b1p = jnp.pad(b1, ((0, 0), (0, hid_pad - hid)))
        w2p = jnp.pad(w2, ((0, hid_pad - hid), (0, 0)))
        w13 = jnp.concatenate([w1p, w3], axis=1).astype(dtype)
        b13 = jnp.concatenate([b1p, b3], axis=1).astype(dtype)
        return (w13, b13, w2p.astype(dtype), b2.astype(dtype))

    def pack_split(p, rows_a):
        w13, b13, w2, b2 = pack(p)
        return (w13[:rows_a], w13[rows_a:], b13, w2, b2)

    d = cfg["d_model"]
    fe = feature_encode_dim
    return {
        "fe": pack(params["feature_encoder"]),
        "enc_first": pack_split(params["encoder_first"], d),     # cat([x, feature])
        "enc_shared": pack(params["encoder_shared"]),
        "dec_shared": pack(params["decoder_shared"]),
        "dec_last": pack(params["decoder_last"]),
        "temporal": pack_split(params["temporal_decoder"], fe),  # cat([feature, decoded])
        "residual_proj": tuple(a.astype(dtype) for a in params["residual_proj"]),
    }


# -----------------------------------------------------------------------------
# TiDE forward (hot path in two fused Pallas kernels, reshape glue in JAX)
# -----------------------------------------------------------------------------
def tide_forward(x_enc, kp, cfg):
    B, L, D = x_enc.shape
    assert L == cfg["seq_len"] and D == cfg["d_model"]
    CP = cfg["c_out"] * cfg["pred_len"]
    assert (L * CP) % D == 0 and CP >= D, (
        "need seq_len*c_out*pred_len divisible by d_model and c_out*pred_len >= "
        "d_model for the reshape(B,-1,d_model)[:, -seq_len:, :] step")

    # Stage 1 only has to produce the last L*D decoded elements per batch
    # (everything earlier is dropped by the [:, -L:, :] tail slice), and each
    # decoded row depends only on its own input row -> only the last
    # R = ceil(L*D / CP) timesteps go through the encoder/decoder stack.
    R = min(L, -(-(L * D) // CP))
    x_tail = x_enc[:, L - R:, :].reshape(B * R, D)
    decoded_tail = encoder_stack(x_tail, kp, cfg)                      # (B*R, CP)
    decoded2d = (decoded_tail.reshape(B, R * CP)[:, R * CP - L * D:]
                 .reshape(B * L, D))                                   # XLA glue

    x2d = x_enc.reshape(B * L, D)
    out = temporal_head(x2d, decoded2d, kp, cfg, B)                    # (B, pred_len)
    return out.reshape(B, cfg["pred_len"], 1)


# -----------------------------------------------------------------------------
# Pure-JAX reference (for sanity checking the kernels)
# -----------------------------------------------------------------------------
def _resblock_ref(x, p):
    w1, b1, w2, b2, w3, b3 = p
    h = jnp.maximum(x @ w1 + b1, 0.0)
    return h @ w2 + b2 + (x @ w3 + b3)


def tide_forward_ref(x_enc, params, cfg):
    B, L, D = x_enc.shape
    x2d = x_enc.reshape(B * L, D)
    feature = _resblock_ref(x2d, params["feature_encoder"])
    hidden = _resblock_ref(jnp.concatenate([x2d, feature], -1), params["encoder_first"])
    for _ in range(cfg["e_layers"] - 1):
        hidden = _resblock_ref(hidden, params["encoder_shared"])
    dec = hidden
    for _ in range(cfg["d_layers"] - 1):
        dec = _resblock_ref(dec, params["decoder_shared"])
    decoded = _resblock_ref(dec, params["decoder_last"]).reshape(B, -1, D)[:, -L:, :]
    fe_dim = feature.shape[-1]
    td_in = jnp.concatenate([feature.reshape(B, L, fe_dim), decoded], -1).reshape(B * L, -1)
    dec_out = _resblock_ref(td_in, params["temporal_decoder"]).reshape(B, L, 1)
    w, b = params["residual_proj"]
    proj = dec_out.transpose(0, 2, 1).reshape(B, L) @ w + b
    return proj.reshape(B, 1, cfg["pred_len"]).transpose(0, 2, 1)


# -----------------------------------------------------------------------------
if __name__ == "__main__":
    cfg = {
        "seq_len": 8,
        "label_len": 4,
        "pred_len": 8,
        "d_model": 32,
        "e_layers": 2,
        "d_layers": 2,
        "c_out": 4,   # c_out*pred_len (=32) == d_model; divisibility holds
    }

    key = jax.random.PRNGKey(0)
    k_param, k_x = jax.random.split(key)
    params = init_tide_params(k_param, cfg, feature_encode_dim=2)

    B = 2
    x_enc = jax.random.normal(k_x, (B, cfg["seq_len"], cfg["d_model"]), jnp.float32)

    with jax.default_matmul_precision("highest"):
        ref = tide_forward_ref(x_enc, params, cfg)

    fwd = jax.jit(functools.partial(tide_forward, cfg=cfg))

    # f32 hot path
    kp32 = prepare_kernel_params(params, cfg, feature_encode_dim=2, dtype=jnp.float32)
    out32 = jax.block_until_ready(fwd(x_enc, kp32))
    assert out32.shape == (B, cfg["pred_len"], 1), out32.shape
    err32 = float(jnp.max(jnp.abs(out32 - ref)))
    assert jnp.allclose(out32, ref, atol=1e-3, rtol=1e-3), f"f32 mismatch: {err32}"

    # bf16 hot path (halves HBM/VMEM traffic; f32 accumulation inside kernels)
    kp16 = prepare_kernel_params(params, cfg, feature_encode_dim=2, dtype=jnp.bfloat16)
    out16 = jax.block_until_ready(fwd(x_enc.astype(jnp.bfloat16), kp16))
    assert out16.shape == (B, cfg["pred_len"], 1), out16.shape
    err16 = float(jnp.max(jnp.abs(out16.astype(jnp.float32) - ref)))
    assert jnp.allclose(out16.astype(jnp.float32), ref, atol=1.5e-1, rtol=5e-2), (
        f"bf16 mismatch: {err16}")

    print("KERNEL_OK")
</pallas_src>

<mosaic_0001>
module attributes {stable_mosaic.version = 11 : i64} {
  func.func @_encoder_stack_kernel(%arg0: i32, %arg1: memref<16x32xf32, #tpu.memory_space<vmem>>, %arg2: memref<32x130xf32, #tpu.memory_space<vmem>>, %arg3: memref<1x130xf32, #tpu.memory_space<vmem>>, %arg4: memref<128x2xf32, #tpu.memory_space<vmem>>, %arg5: memref<1x2xf32, #tpu.memory_space<vmem>>, %arg6: memref<32x160xf32, #tpu.memory_space<vmem>>, %arg7: memref<2x160xf32, #tpu.memory_space<vmem>>, %arg8: memref<1x160xf32, #tpu.memory_space<vmem>>, %arg9: memref<128x32xf32, #tpu.memory_space<vmem>>, %arg10: memref<1x32xf32, #tpu.memory_space<vmem>>, %arg11: memref<32x160xf32, #tpu.memory_space<vmem>>, %arg12: memref<1x160xf32, #tpu.memory_space<vmem>>, %arg13: memref<128x32xf32, #tpu.memory_space<vmem>>, %arg14: memref<1x32xf32, #tpu.memory_space<vmem>>, %arg15: memref<32x160xf32, #tpu.memory_space<vmem>>, %arg16: memref<1x160xf32, #tpu.memory_space<vmem>>, %arg17: memref<128x32xf32, #tpu.memory_space<vmem>>, %arg18: memref<1x32xf32, #tpu.memory_space<vmem>>, %arg19: memref<32x160xf32, #tpu.memory_space<vmem>>, %arg20: memref<1x160xf32, #tpu.memory_space<vmem>>, %arg21: memref<128x32xf32, #tpu.memory_space<vmem>>, %arg22: memref<1x32xf32, #tpu.memory_space<vmem>>, %arg23: memref<16x32xf32, #tpu.memory_space<vmem>>) attributes {dimension_semantics = [#tpu.dimension_semantics<parallel>], iteration_bounds = array<i64: 1>, scalar_prefetch = 0 : i64, scratch_operands = 0 : i64, tpu.core_type = #tpu.core_type<tc>, window_params = [{transform_indices = @transform_0, window_bounds = array<i64: 16, 32>}, {pipeline_mode = #tpu.pipeline_mode<synchronous>, transform_indices = @transform_1, window_bounds = array<i64: 32, 130>}, {pipeline_mode = #tpu.pipeline_mode<synchronous>, transform_indices = @transform_2, window_bounds = array<i64: 1, 130>}, {pipeline_mode = #tpu.pipeline_mode<synchronous>, transform_indices = @transform_3, window_bounds = array<i64: 128, 2>}, {pipeline_mode = #tpu.pipeline_mode<synchronous>, transform_indices = @transform_4, window_bounds = array<i64: 1, 2>}, {pipeline_mode = #tpu.pipeline_mode<synchronous>, transform_indices = @transform_5, window_bounds = array<i64: 32, 160>}, {pipeline_mode = #tpu.pipeline_mode<synchronous>, transform_indices = @transform_6, window_bounds = array<i64: 2, 160>}, {pipeline_mode = #tpu.pipeline_mode<synchronous>, transform_indices = @transform_7, window_bounds = array<i64: 1, 160>}, {pipeline_mode = #tpu.pipeline_mode<synchronous>, transform_indices = @transform_8, window_bounds = array<i64: 128, 32>}, {pipeline_mode = #tpu.pipeline_mode<synchronous>, transform_indices = @transform_9, window_bounds = array<i64: 1, 32>}, {pipeline_mode = #tpu.pipeline_mode<synchronous>, transform_indices = @transform_10, window_bounds = array<i64: 32, 160>}, {pipeline_mode = #tpu.pipeline_mode<synchronous>, transform_indices = @transform_11, window_bounds = array<i64: 1, 160>}, {pipeline_mode = #tpu.pipeline_mode<synchronous>, transform_indices = @transform_12, window_bounds = array<i64: 128, 32>}, {pipeline_mode = #tpu.pipeline_mode<synchronous>, transform_indices = @transform_13, window_bounds = array<i64: 1, 32>}, {pipeline_mode = #tpu.pipeline_mode<synchronous>, transform_indices = @transform_14, window_bounds = array<i64: 32, 160>}, {pipeline_mode = #tpu.pipeline_mode<synchronous>, transform_indices = @transform_15, window_bounds = array<i64: 1, 160>}, {pipeline_mode = #tpu.pipeline_mode<synchronous>, transform_indices = @transform_16, window_bounds = array<i64: 128, 32>}, {pipeline_mode = #tpu.pipeline_mode<synchronous>, transform_indices = @transform_17, window_bounds = array<i64: 1, 32>}, {pipeline_mode = #tpu.pipeline_mode<synchronous>, transform_indices = @transform_18, window_bounds = array<i64: 32, 160>}, {pipeline_mode = #tpu.pipeline_mode<synchronous>, transform_indices = @transform_19, window_bounds = array<i64: 1, 160>}, {pipeline_mode = #tpu.pipeline_mode<synchronous>, transform_indices = @transform_20, window_bounds = array<i64: 128, 32>}, {pipeline_mode = #tpu.pipeline_mode<synchronous>, transform_indices = @transform_21, window_bounds = array<i64: 1, 32>}, {transform_indices = @transform_22, window_bounds = array<i64: 16, 32>}]} {
    %c0 = arith.constant 0 : index
    %c0_0 = arith.constant 0 : index
    %0 = vector.load %arg1[%c0, %c0_0] : memref<16x32xf32, #tpu.memory_space<vmem>>, vector<16x32xf32>
    %c0_1 = arith.constant 0 : index
    %c0_2 = arith.constant 0 : index
    %1 = vector.load %arg2[%c0_1, %c0_2] : memref<32x130xf32, #tpu.memory_space<vmem>>, vector<32x130xf32>
    %c0_3 = arith.constant 0 : index
    %c0_4 = arith.constant 0 : index
    %2 = vector.load %arg3[%c0_3, %c0_4] : memref<1x130xf32, #tpu.memory_space<vmem>>, vector<1x130xf32>
    %c0_5 = arith.constant 0 : index
    %c0_6 = arith.constant 0 : index
    %3 = vector.load %arg4[%c0_5, %c0_6] : memref<128x2xf32, #tpu.memory_space<vmem>>, vector<128x2xf32>
    %c0_7 = arith.constant 0 : index
    %c0_8 = arith.constant 0 : index
    %4 = vector.load %arg5[%c0_7, %c0_8] : memref<1x2xf32, #tpu.memory_space<vmem>>, vector<1x2xf32>
    %cst = arith.constant dense<0.000000e+00> : vector<16x130xf32>
    %5 = tpu.matmul %0, %1, %cst {dimension_numbers = #tpu.dot_dimension_numbers<[1], [0], [0], [1], [0, 0, 1, 1], [], []>} : vector<16x32xf32>, vector<32x130xf32>, vector<16x130xf32> -> vector<16x130xf32>
    %6 = vector.broadcast %2 : vector<1x130xf32> to vector<16x130xf32>
    %7 = arith.addf %5, %6 : vector<16x130xf32>
    %8 = vector.extract_strided_slice %7 {offsets = [0, 0], sizes = [16, 128], strides = [1, 1]} : vector<16x130xf32> to vector<16x128xf32>
    %cst_9 = arith.constant 0.000000e+00 : f32
    %9 = vector.broadcast %cst_9 : f32 to vector<16x128xf32>
    %10 = arith.maximumf %8, %9 : vector<16x128xf32>
    %11 = vector.extract_strided_slice %7 {offsets = [0, 128], sizes = [16, 2], strides = [1, 1]} : vector<16x130xf32> to vector<16x2xf32>
    %cst_10 = arith.constant dense<0.000000e+00> : vector<16x2xf32>
    %12 = tpu.matmul %10, %3, %cst_10 {dimension_numbers = #tpu.dot_dimension_numbers<[1], [0], [0], [1], [0, 0, 1, 1], [], []>} : vector<16x128xf32>, vector<128x2xf32>, vector<16x2xf32> -> vector<16x2xf32>
    %13 = vector.broadcast %4 : vector<1x2xf32> to vector<16x2xf32>
    %14 = arith.addf %12, %13 : vector<16x2xf32>
    %15 = arith.addf %14, %11 : vector<16x2xf32>
    %c0_11 = arith.constant 0 : index
    %c0_12 = arith.constant 0 : index
    %16 = vector.load %arg6[%c0_11, %c0_12] : memref<32x160xf32, #tpu.memory_space<vmem>>, vector<32x160xf32>
    %cst_13 = arith.constant dense<0.000000e+00> : vector<16x160xf32>
    %17 = tpu.matmul %0, %16, %cst_13 {dimension_numbers = #tpu.dot_dimension_numbers<[1], [0], [0], [1], [0, 0, 1, 1], [], []>} : vector<16x32xf32>, vector<32x160xf32>, vector<16x160xf32> -> vector<16x160xf32>
    %c0_14 = arith.constant 0 : index
    %c0_15 = arith.constant 0 : index
    %18 = vector.load %arg7[%c0_14, %c0_15] : memref<2x160xf32, #tpu.memory_space<vmem>>, vector<2x160xf32>
    %19 = vector.extract_strided_slice %15 {offsets = [0, 0], sizes = [16, 1], strides = [1, 1]} : vector<16x2xf32> to vector<16x1xf32>
    %20 = vector.extract_strided_slice %18 {offsets = [0, 0], sizes = [1, 160], strides = [1, 1]} : vector<2x160xf32> to vector<1x160xf32>
    %21 = vector.broadcast %19 : vector<16x1xf32> to vector<16x160xf32>
    %22 = vector.broadcast %20 : vector<1x160xf32> to vector<16x160xf32>
    %23 = arith.mulf %21, %22 : vector<16x160xf32>
    %24 = arith.addf %17, %23 : vector<16x160xf32>
    %25 = vector.extract_strided_slice %15 {offsets = [0, 1], sizes = [16, 1], strides = [1, 1]} : vector<16x2xf32> to vector<16x1xf32>
    %26 = vector.extract_strided_slice %18 {offsets = [1, 0], sizes = [1, 160], strides = [1, 1]} : vector<2x160xf32> to vector<1x160xf32>
    %27 = vector.broadcast %25 : vector<16x1xf32> to vector<16x160xf32>
    %28 = vector.broadcast %26 : vector<1x160xf32> to vector<16x160xf32>
    %29 = arith.mulf %27, %28 : vector<16x160xf32>
    %30 = arith.addf %24, %29 : vector<16x160xf32>
    %c0_16 = arith.constant 0 : index
    %c0_17 = arith.constant 0 : index
    %31 = vector.load %arg8[%c0_16, %c0_17] : memref<1x160xf32, #tpu.memory_space<vmem>>, vector<1x160xf32>
    %32 = vector.broadcast %31 : vector<1x160xf32> to vector<16x160xf32>
    %33 = arith.addf %30, %32 : vector<16x160xf32>
    %34 = vector.extract_strided_slice %33 {offsets = [0, 0], sizes = [16, 128], strides = [1, 1]} : vector<16x160xf32> to vector<16x128xf32>
    %cst_18 = arith.constant 0.000000e+00 : f32
    %35 = vector.broadcast %cst_18 : f32 to vector<16x128xf32>
    %36 = arith.maximumf %34, %35 : vector<16x128xf32>
    %c0_19 = arith.constant 0 : index
    %c0_20 = arith.constant 0 : index
    %37 = vector.load %arg9[%c0_19, %c0_20] : memref<128x32xf32, #tpu.memory_space<vmem>>, vector<128x32xf32>
    %cst_21 = arith.constant dense<0.000000e+00> : vector<16x32xf32>
    %38 = tpu.matmul %36, %37, %cst_21 {dimension_numbers = #tpu.dot_dimension_numbers<[1], [0], [0], [1], [0, 0, 1, 1], [], []>} : vector<16x128xf32>, vector<128x32xf32>, vector<16x32xf32> -> vector<16x32xf32>
    %c0_22 = arith.constant 0 : index
    %c0_23 = arith.constant 0 : index
    %39 = vector.load %arg10[%c0_22, %c0_23] : memref<1x32xf32, #tpu.memory_space<vmem>>, vector<1x32xf32>
    %40 = vector.broadcast %39 : vector<1x32xf32> to vector<16x32xf32>
    %41 = arith.addf %38, %40 : vector<16x32xf32>
    %42 = vector.extract_strided_slice %33 {offsets = [0, 128], sizes = [16, 32], strides = [1, 1]} : vector<16x160xf32> to vector<16x32xf32>
    %43 = arith.addf %41, %42 : vector<16x32xf32>
    %c0_24 = arith.constant 0 : index
    %c0_25 = arith.constant 0 : index
    %44 = vector.load %arg11[%c0_24, %c0_25] : memref<32x160xf32, #tpu.memory_space<vmem>>, vector<32x160xf32>
    %c0_26 = arith.constant 0 : index
    %c0_27 = arith.constant 0 : index
    %45 = vector.load %arg12[%c0_26, %c0_27] : memref<1x160xf32, #tpu.memory_space<vmem>>, vector<1x160xf32>
    %c0_28 = arith.constant 0 : index
    %c0_29 = arith.constant 0 : index
    %46 = vector.load %arg13[%c0_28, %c0_29] : memref<128x32xf32, #tpu.memory_space<vmem>>, vector<128x32xf32>
    %c0_30 = arith.constant 0 : index
    %c0_31 = arith.constant 0 : index
    %47 = vector.load %arg14[%c0_30, %c0_31] : memref<1x32xf32, #tpu.memory_space<vmem>>, vector<1x32xf32>
    %cst_32 = arith.constant dense<0.000000e+00> : vector<16x160xf32>
    %48 = tpu.matmul %43, %44, %cst_32 {dimension_numbers = #tpu.dot_dimension_numbers<[1], [0], [0], [1], [0, 0, 1, 1], [], []>} : vector<16x32xf32>, vector<32x160xf32>, vector<16x160xf32> -> vector<16x160xf32>
    %49 = vector.broadcast %45 : vector<1x160xf32> to vector<16x160xf32>
    %50 = arith.addf %48, %49 : vector<16x160xf32>
    %51 = vector.extract_strided_slice %50 {offsets = [0, 0], sizes = [16, 128], strides = [1, 1]} : vector<16x160xf32> to vector<16x128xf32>
    %cst_33 = arith.constant 0.000000e+00 : f32
    %52 = vector.broadcast %cst_33 : f32 to vector<16x128xf32>
    %53 = arith.maximumf %51, %52 : vector<16x128xf32>
    %54 = vector.extract_strided_slice %50 {offsets = [0, 128], sizes = [16, 32], strides = [1, 1]} : vector<16x160xf32> to vector<16x32xf32>
    %cst_34 = arith.constant dense<0.000000e+00> : vector<16x32xf32>
    %55 = tpu.matmul %53, %46, %cst_34 {dimension_numbers = #tpu.dot_dimension_numbers<[1], [0], [0], [1], [0, 0, 1, 1], [], []>} : vector<16x128xf32>, vector<128x32xf32>, vector<16x32xf32> -> vector<16x32xf32>
    %56 = vector.broadcast %47 : vector<1x32xf32> to vector<16x32xf32>
    %57 = arith.addf %55, %56 : vector<16x32xf32>
    %58 = arith.addf %57, %54 : vector<16x32xf32>
    %c0_35 = arith.constant 0 : index
    %c0_36 = arith.constant 0 : index
    %59 = vector.load %arg15[%c0_35, %c0_36] : memref<32x160xf32, #tpu.memory_space<vmem>>, vector<32x160xf32>
    %c0_37 = arith.constant 0 : index
    %c0_38 = arith.constant 0 : index
    %60 = vector.load %arg16[%c0_37, %c0_38] : memref<1x160xf32, #tpu.memory_space<vmem>>, vector<1x160xf32>
    %c0_39 = arith.constant 0 : index
    %c0_40 = arith.constant 0 : index
    %61 = vector.load %arg17[%c0_39, %c0_40] : memref<128x32xf32, #tpu.memory_space<vmem>>, vector<128x32xf32>
    %c0_41 = arith.constant 0 : index
    %c0_42 = arith.constant 0 : index
    %62 = vector.load %arg18[%c0_41, %c0_42] : memref<1x32xf32, #tpu.memory_space<vmem>>, vector<1x32xf32>
    %cst_43 = arith.constant dense<0.000000e+00> : vector<16x160xf32>
    %63 = tpu.matmul %58, %59, %cst_43 {dimension_numbers = #tpu.dot_dimension_numbers<[1], [0], [0], [1], [0, 0, 1, 1], [], []>} : vector<16x32xf32>, vector<32x160xf32>, vector<16x160xf32> -> vector<16x160xf32>
    %64 = vector.broadcast %60 : vector<1x160xf32> to vector<16x160xf32>
    %65 = arith.addf %63, %64 : vector<16x160xf32>
    %66 = vector.extract_strided_slice %65 {offsets = [0, 0], sizes = [16, 128], strides = [1, 1]} : vector<16x160xf32> to vector<16x128xf32>
    %cst_44 = arith.constant 0.000000e+00 : f32
    %67 = vector.broadcast %cst_44 : f32 to vector<16x128xf32>
    %68 = arith.maximumf %66, %67 : vector<16x128xf32>
    %69 = vector.extract_strided_slice %65 {offsets = [0, 128], sizes = [16, 32], strides = [1, 1]} : vector<16x160xf32> to vector<16x32xf32>
    %cst_45 = arith.constant dense<0.000000e+00> : vector<16x32xf32>
    %70 = tpu.matmul %68, %61, %cst_45 {dimension_numbers = #tpu.dot_dimension_numbers<[1], [0], [0], [1], [0, 0, 1, 1], [], []>} : vector<16x128xf32>, vector<128x32xf32>, vector<16x32xf32> -> vector<16x32xf32>
    %71 = vector.broadcast %62 : vector<1x32xf32> to vector<16x32xf32>
    %72 = arith.addf %70, %71 : vector<16x32xf32>
    %73 = arith.addf %72, %69 : vector<16x32xf32>
    %c0_46 = arith.constant 0 : index
    %c0_47 = arith.constant 0 : index
    %74 = vector.load %arg19[%c0_46, %c0_47] : memref<32x160xf32, #tpu.memory_space<vmem>>, vector<32x160xf32>
    %c0_48 = arith.constant 0 : index
    %c0_49 = arith.constant 0 : index
    %75 = vector.load %arg20[%c0_48, %c0_49] : memref<1x160xf32, #tpu.memory_space<vmem>>, vector<1x160xf32>
    %c0_50 = arith.constant 0 : index
    %c0_51 = arith.constant 0 : index
    %76 = vector.load %arg21[%c0_50, %c0_51] : memref<128x32xf32, #tpu.memory_space<vmem>>, vector<128x32xf32>
    %c0_52 = arith.constant 0 : index
    %c0_53 = arith.constant 0 : index
    %77 = vector.load %arg22[%c0_52, %c0_53] : memref<1x32xf32, #tpu.memory_space<vmem>>, vector<1x32xf32>
    %cst_54 = arith.constant dense<0.000000e+00> : vector<16x160xf32>
    %78 = tpu.matmul %73, %74, %cst_54 {dimension_numbers = #tpu.dot_dimension_numbers<[1], [0], [0], [1], [0, 0, 1, 1], [], []>} : vector<16x32xf32>, vector<32x160xf32>, vector<16x160xf32> -> vector<16x160xf32>
    %79 = vector.broadcast %75 : vector<1x160xf32> to vector<16x160xf32>
    %80 = arith.addf %78, %79 : vector<16x160xf32>
    %81 = vector.extract_strided_slice %80 {offsets = [0, 0], sizes = [16, 128], strides = [1, 1]} : vector<16x160xf32> to vector<16x128xf32>
    %cst_55 = arith.constant 0.000000e+00 : f32
    %82 = vector.broadcast %cst_55 : f32 to vector<16x128xf32>
    %83 = arith.maximumf %81, %82 : vector<16x128xf32>
    %84 = vector.extract_strided_slice %80 {offsets = [0, 128], sizes = [16, 32], strides = [1, 1]} : vector<16x160xf32> to vector<16x32xf32>
    %cst_56 = arith.constant dense<0.000000e+00> : vector<16x32xf32>
    %85 = tpu.matmul %83, %76, %cst_56 {dimension_numbers = #tpu.dot_dimension_numbers<[1], [0], [0], [1], [0, 0, 1, 1], [], []>} : vector<16x128xf32>, vector<128x32xf32>, vector<16x32xf32> -> vector<16x32xf32>
    %86 = vector.broadcast %77 : vector<1x32xf32> to vector<16x32xf32>
    %87 = arith.addf %85, %86 : vector<16x32xf32>
    %88 = arith.addf %87, %84 : vector<16x32xf32>
    %c0_57 = arith.constant 0 : index
    %c0_58 = arith.constant 0 : index
    %89 = vector.load %arg23[%c0_57, %c0_58] : memref<16x32xf32, #tpu.memory_space<vmem>>, vector<16x32xf32>
    tpu.vector_store %arg23[%c0_57, %c0_58], %88 {strides = array<i32>} : memref<16x32xf32, #tpu.memory_space<vmem>>, vector<16x32xf32>,
    return
  }
  func.func @transform_0(%arg0: i32) -> (i32, i32) {
    %c0_i32 = arith.constant 0 : i32
    %c0_i32_0 = arith.constant 0 : i32
    return %arg0, %c0_i32 : i32, i32
  }
  func.func @transform_1(%arg0: i32) -> (i32, i32) {
    %c0_i32 = arith.constant 0 : i32
    %c0_i32_0 = arith.constant 0 : i32
    %c0_i32_1 = arith.constant 0 : i32
    return %c0_i32, %c0_i32_0 : i32, i32
  }
  func.func @transform_2(%arg0: i32) -> (i32, i32) {
    %c0_i32 = arith.constant 0 : i32
    %c0_i32_0 = arith.constant 0 : i32
    %c0_i32_1 = arith.constant 0 : i32
    return %c0_i32, %c0_i32_0 : i32, i32
  }
  func.func @transform_3(%arg0: i32) -> (i32, i32) {
    %c0_i32 = arith.constant 0 : i32
    %c0_i32_0 = arith.constant 0 : i32
    %c0_i32_1 = arith.constant 0 : i32
    return %c0_i32, %c0_i32_0 : i32, i32
  }
  func.func @transform_4(%arg0: i32) -> (i32, i32) {
    %c0_i32 = arith.constant 0 : i32
    %c0_i32_0 = arith.constant 0 : i32
    %c0_i32_1 = arith.constant 0 : i32
    return %c0_i32, %c0_i32_0 : i32, i32
  }
  func.func @transform_5(%arg0: i32) -> (i32, i32) {
    %c0_i32 = arith.constant 0 : i32
    %c0_i32_0 = arith.constant 0 : i32
    %c0_i32_1 = arith.constant 0 : i32
    return %c0_i32, %c0_i32_0 : i32, i32
  }
  func.func @transform_6(%arg0: i32) -> (i32, i32) {
    %c0_i32 = arith.constant 0 : i32
    %c0_i32_0 = arith.constant 0 : i32
    %c0_i32_1 = arith.constant 0 : i32
    return %c0_i32, %c0_i32_0 : i32, i32
  }
  func.func @transform_7(%arg0: i32) -> (i32, i32) {
    %c0_i32 = arith.constant 0 : i32
    %c0_i32_0 = arith.constant 0 : i32
    %c0_i32_1 = arith.constant 0 : i32
    return %c0_i32, %c0_i32_0 : i32, i32
  }
  func.func @transform_8(%arg0: i32) -> (i32, i32) {
    %c0_i32 = arith.constant 0 : i32
    %c0_i32_0 = arith.constant 0 : i32
    %c0_i32_1 = arith.constant 0 : i32
    return %c0_i32, %c0_i32_0 : i32, i32
  }
  func.func @transform_9(%arg0: i32) -> (i32, i32) {
    %c0_i32 = arith.constant 0 : i32
    %c0_i32_0 = arith.constant 0 : i32
    %c0_i32_1 = arith.constant 0 : i32
    return %c0_i32, %c0_i32_0 : i32, i32
  }
  func.func @transform_10(%arg0: i32) -> (i32, i32) {
    %c0_i32 = arith.constant 0 : i32
    %c0_i32_0 = arith.constant 0 : i32
    %c0_i32_1 = arith.constant 0 : i32
    return %c0_i32, %c0_i32_0 : i32, i32
  }
  func.func @transform_11(%arg0: i32) -> (i32, i32) {
    %c0_i32 = arith.constant 0 : i32
    %c0_i32_0 = arith.constant 0 : i32
    %c0_i32_1 = arith.constant 0 : i32
    return %c0_i32, %c0_i32_0 : i32, i32
  }
  func.func @transform_12(%arg0: i32) -> (i32, i32) {
    %c0_i32 = arith.constant 0 : i32
    %c0_i32_0 = arith.constant 0 : i32
    %c0_i32_1 = arith.constant 0 : i32
    return %c0_i32, %c0_i32_0 : i32, i32
  }
  func.func @transform_13(%arg0: i32) -> (i32, i32) {
    %c0_i32 = arith.constant 0 : i32
    %c0_i32_0 = arith.constant 0 : i32
    %c0_i32_1 = arith.constant 0 : i32
    return %c0_i32, %c0_i32_0 : i32, i32
  }
  func.func @transform_14(%arg0: i32) -> (i32, i32) {
    %c0_i32 = arith.constant 0 : i32
    %c0_i32_0 = arith.constant 0 : i32
    %c0_i32_1 = arith.constant 0 : i32
    return %c0_i32, %c0_i32_0 : i32, i32
  }
  func.func @transform_15(%arg0: i32) -> (i32, i32) {
    %c0_i32 = arith.constant 0 : i32
    %c0_i32_0 = arith.constant 0 : i32
    %c0_i32_1 = arith.constant 0 : i32
    return %c0_i32, %c0_i32_0 : i32, i32
  }
  func.func @transform_16(%arg0: i32) -> (i32, i32) {
    %c0_i32 = arith.constant 0 : i32
    %c0_i32_0 = arith.constant 0 : i32
    %c0_i32_1 = arith.constant 0 : i32
    return %c0_i32, %c0_i32_0 : i32, i32
  }
  func.func @transform_17(%arg0: i32) -> (i32, i32) {
    %c0_i32 = arith.constant 0 : i32
    %c0_i32_0 = arith.constant 0 : i32
    %c0_i32_1 = arith.constant 0 : i32
    return %c0_i32, %c0_i32_0 : i32, i32
  }
  func.func @transform_18(%arg0: i32) -> (i32, i32) {
    %c0_i32 = arith.constant 0 : i32
    %c0_i32_0 = arith.constant 0 : i32
    %c0_i32_1 = arith.constant 0 : i32
    return %c0_i32, %c0_i32_0 : i32, i32
  }
  func.func @transform_19(%arg0: i32) -> (i32, i32) {
    %c0_i32 = arith.constant 0 : i32
    %c0_i32_0 = arith.constant 0 : i32
    %c0_i32_1 = arith.constant 0 : i32
    return %c0_i32, %c0_i32_0 : i32, i32
  }
  func.func @transform_20(%arg0: i32) -> (i32, i32) {
    %c0_i32 = arith.constant 0 : i32
    %c0_i32_0 = arith.constant 0 : i32
    %c0_i32_1 = arith.constant 0 : i32
    return %c0_i32, %c0_i32_0 : i32, i32
  }
  func.func @transform_21(%arg0: i32) -> (i32, i32) {
    %c0_i32 = arith.constant 0 : i32
    %c0_i32_0 = arith.constant 0 : i32
    %c0_i32_1 = arith.constant 0 : i32
    return %c0_i32, %c0_i32_0 : i32, i32
  }
  func.func @transform_22(%arg0: i32) -> (i32, i32) {
    %c0_i32 = arith.constant 0 : i32
    %c0_i32_0 = arith.constant 0 : i32
    return %arg0, %c0_i32 : i32, i32
  }
}

module attributes {stable_mosaic.version = 11 : i64} {
  func.func @_temporal_head_kernel(%arg0: i32, %arg1: memref<16x32xf32, #tpu.memory_space<vmem>>, %arg2: memref<16x32xf32, #tpu.memory_space<vmem>>, %arg3: memref<32x130xf32, #tpu.memory_space<vmem>>, %arg4: memref<1x130xf32, #tpu.memory_space<vmem>>, %arg5: memref<128x2xf32, #tpu.memory_space<vmem>>, %arg6: memref<1x2xf32, #tpu.memory_space<vmem>>, %arg7: memref<2x129xf32, #tpu.memory_space<vmem>>, %arg8: memref<32x129xf32, #tpu.memory_space<vmem>>, %arg9: memref<1x129xf32, #tpu.memory_space<vmem>>, %arg10: memref<128x1xf32, #tpu.memory_space<vmem>>, %arg11: memref<1x1xf32, #tpu.memory_space<vmem>>, %arg12: memref<8x8xf32, #tpu.memory_space<vmem>>, %arg13: memref<1x8xf32, #tpu.memory_space<vmem>>, %arg14: memref<2x8xf32, #tpu.memory_space<vmem>>) attributes {dimension_semantics = [#tpu.dimension_semantics<parallel>], iteration_bounds = array<i64: 1>, scalar_prefetch = 0 : i64, scratch_operands = 0 : i64, tpu.core_type = #tpu.core_type<tc>, window_params = [{transform_indices = @transform_0, window_bounds = array<i64: 16, 32>}, {transform_indices = @transform_1, window_bounds = array<i64: 16, 32>}, {pipeline_mode = #tpu.pipeline_mode<synchronous>, transform_indices = @transform_2, window_bounds = array<i64: 32, 130>}, {pipeline_mode = #tpu.pipeline_mode<synchronous>, transform_indices = @transform_3, window_bounds = array<i64: 1, 130>}, {pipeline_mode = #tpu.pipeline_mode<synchronous>, transform_indices = @transform_4, window_bounds = array<i64: 128, 2>}, {pipeline_mode = #tpu.pipeline_mode<synchronous>, transform_indices = @transform_5, window_bounds = array<i64: 1, 2>}, {pipeline_mode = #tpu.pipeline_mode<synchronous>, transform_indices = @transform_6, window_bounds = array<i64: 2, 129>}, {pipeline_mode = #tpu.pipeline_mode<synchronous>, transform_indices = @transform_7, window_bounds = array<i64: 32, 129>}, {pipeline_mode = #tpu.pipeline_mode<synchronous>, transform_indices = @transform_8, window_bounds = array<i64: 1, 129>}, {pipeline_mode = #tpu.pipeline_mode<synchronous>, transform_indices = @transform_9, window_bounds = array<i64: 128, 1>}, {pipeline_mode = #tpu.pipeline_mode<synchronous>, transform_indices = @transform_10, window_bounds = array<i64: 1, 1>}, {pipeline_mode = #tpu.pipeline_mode<synchronous>, transform_indices = @transform_11, window_bounds = array<i64: 8, 8>}, {pipeline_mode = #tpu.pipeline_mode<synchronous>, transform_indices = @transform_12, window_bounds = array<i64: 1, 8>}, {transform_indices = @transform_13, window_bounds = array<i64: 2, 8>}]} {
    %c0 = arith.constant 0 : index
    %c0_0 = arith.constant 0 : index
    %0 = vector.load %arg1[%c0, %c0_0] : memref<16x32xf32, #tpu.memory_space<vmem>>, vector<16x32xf32>
    %c0_1 = arith.constant 0 : index
    %c0_2 = arith.constant 0 : index
    %1 = vector.load %arg2[%c0_1, %c0_2] : memref<16x32xf32, #tpu.memory_space<vmem>>, vector<16x32xf32>
    %c0_3 = arith.constant 0 : index
    %c0_4 = arith.constant 0 : index
    %2 = vector.load %arg3[%c0_3, %c0_4] : memref<32x130xf32, #tpu.memory_space<vmem>>, vector<32x130xf32>
    %c0_5 = arith.constant 0 : index
    %c0_6 = arith.constant 0 : index
    %3 = vector.load %arg4[%c0_5, %c0_6] : memref<1x130xf32, #tpu.memory_space<vmem>>, vector<1x130xf32>
    %c0_7 = arith.constant 0 : index
    %c0_8 = arith.constant 0 : index
    %4 = vector.load %arg5[%c0_7, %c0_8] : memref<128x2xf32, #tpu.memory_space<vmem>>, vector<128x2xf32>
    %c0_9 = arith.constant 0 : index
    %c0_10 = arith.constant 0 : index
    %5 = vector.load %arg6[%c0_9, %c0_10] : memref<1x2xf32, #tpu.memory_space<vmem>>, vector<1x2xf32>
    %cst = arith.constant dense<0.000000e+00> : vector<16x130xf32>
    %6 = tpu.matmul %0, %2, %cst {dimension_numbers = #tpu.dot_dimension_numbers<[1], [0], [0], [1], [0, 0, 1, 1], [], []>} : vector<16x32xf32>, vector<32x130xf32>, vector<16x130xf32> -> vector<16x130xf32>
    %7 = vector.broadcast %3 : vector<1x130xf32> to vector<16x130xf32>
    %8 = arith.addf %6, %7 : vector<16x130xf32>
    %9 = vector.extract_strided_slice %8 {offsets = [0, 0], sizes = [16, 128], strides = [1, 1]} : vector<16x130xf32> to vector<16x128xf32>
    %cst_11 = arith.constant 0.000000e+00 : f32
    %10 = vector.broadcast %cst_11 : f32 to vector<16x128xf32>
    %11 = arith.maximumf %9, %10 : vector<16x128xf32>
    %12 = vector.extract_strided_slice %8 {offsets = [0, 128], sizes = [16, 2], strides = [1, 1]} : vector<16x130xf32> to vector<16x2xf32>
    %cst_12 = arith.constant dense<0.000000e+00> : vector<16x2xf32>
    %13 = tpu.matmul %11, %4, %cst_12 {dimension_numbers = #tpu.dot_dimension_numbers<[1], [0], [0], [1], [0, 0, 1, 1], [], []>} : vector<16x128xf32>, vector<128x2xf32>, vector<16x2xf32> -> vector<16x2xf32>
    %14 = vector.broadcast %5 : vector<1x2xf32> to vector<16x2xf32>
    %15 = arith.addf %13, %14 : vector<16x2xf32>
    %16 = arith.addf %15, %12 : vector<16x2xf32>
    %c0_13 = arith.constant 0 : index
    %c0_14 = arith.constant 0 : index
    %17 = vector.load %arg8[%c0_13, %c0_14] : memref<32x129xf32, #tpu.memory_space<vmem>>, vector<32x129xf32>
    %cst_15 = arith.constant dense<0.000000e+00> : vector<16x129xf32>
    %18 = tpu.matmul %1, %17, %cst_15 {dimension_numbers = #tpu.dot_dimension_numbers<[1], [0], [0], [1], [0, 0, 1, 1], [], []>} : vector<16x32xf32>, vector<32x129xf32>, vector<16x129xf32> -> vector<16x129xf32>
    %c0_16 = arith.constant 0 : index
    %c0_17 = arith.constant 0 : index
    %19 = vector.load %arg7[%c0_16, %c0_17] : memref<2x129xf32, #tpu.memory_space<vmem>>, vector<2x129xf32>
    %20 = vector.extract_strided_slice %16 {offsets = [0, 0], sizes = [16, 1], strides = [1, 1]} : vector<16x2xf32> to vector<16x1xf32>
    %21 = vector.extract_strided_slice %19 {offsets = [0, 0], sizes = [1, 129], strides = [1, 1]} : vector<2x129xf32> to vector<1x129xf32>
    %22 = vector.broadcast %20 : vector<16x1xf32> to vector<16x129xf32>
    %23 = vector.broadcast %21 : vector<1x129xf32> to vector<16x129xf32>
    %24 = arith.mulf %22, %23 : vector<16x129xf32>
    %25 = arith.addf %18, %24 : vector<16x129xf32>
    %26 = vector.extract_strided_slice %16 {offsets = [0, 1], sizes = [16, 1], strides = [1, 1]} : vector<16x2xf32> to vector<16x1xf32>
    %27 = vector.extract_strided_slice %19 {offsets = [1, 0], sizes = [1, 129], strides = [1, 1]} : vector<2x129xf32> to vector<1x129xf32>
    %28 = vector.broadcast %26 : vector<16x1xf32> to vector<16x129xf32>
    %29 = vector.broadcast %27 : vector<1x129xf32> to vector<16x129xf32>
    %30 = arith.mulf %28, %29 : vector<16x129xf32>
    %31 = arith.addf %25, %30 : vector<16x129xf32>
    %c0_18 = arith.constant 0 : index
    %c0_19 = arith.constant 0 : index
    %32 = vector.load %arg9[%c0_18, %c0_19] : memref<1x129xf32, #tpu.memory_space<vmem>>, vector<1x129xf32>
    %33 = vector.broadcast %32 : vector<1x129xf32> to vector<16x129xf32>
    %34 = arith.addf %31, %33 : vector<16x129xf32>
    %35 = vector.extract_strided_slice %34 {offsets = [0, 0], sizes = [16, 128], strides = [1, 1]} : vector<16x129xf32> to vector<16x128xf32>
    %cst_20 = arith.constant 0.000000e+00 : f32
    %36 = vector.broadcast %cst_20 : f32 to vector<16x128xf32>
    %37 = arith.maximumf %35, %36 : vector<16x128xf32>
    %c0_21 = arith.constant 0 : index
    %c0_22 = arith.constant 0 : index
    %38 = vector.load %arg10[%c0_21, %c0_22] : memref<128x1xf32, #tpu.memory_space<vmem>>, vector<128x1xf32>
    %cst_23 = arith.constant dense<0.000000e+00> : vector<16x1xf32>
    %39 = tpu.matmul %37, %38, %cst_23 {dimension_numbers = #tpu.dot_dimension_numbers<[1], [0], [0], [1], [0, 0, 1, 1], [], []>} : vector<16x128xf32>, vector<128x1xf32>, vector<16x1xf32> -> vector<16x1xf32>
    %c0_24 = arith.constant 0 : index
    %c0_25 = arith.constant 0 : index
    %40 = vector.load %arg11[%c0_24, %c0_25] : memref<1x1xf32, #tpu.memory_space<vmem>>, vector<1x1xf32>
    %41 = vector.broadcast %40 : vector<1x1xf32> to vector<16x1xf32>
    %42 = arith.addf %39, %41 : vector<16x1xf32>
    %43 = vector.extract_strided_slice %34 {offsets = [0, 128], sizes = [16, 1], strides = [1, 1]} : vector<16x129xf32> to vector<16x1xf32>
    %44 = arith.addf %42, %43 : vector<16x1xf32>
    %45 = vector.shape_cast %44 : vector<16x1xf32> to vector<2x8xf32>
    %c0_26 = arith.constant 0 : index
    %c0_27 = arith.constant 0 : index
    %46 = vector.load %arg12[%c0_26, %c0_27] : memref<8x8xf32, #tpu.memory_space<vmem>>, vector<8x8xf32>
    %cst_28 = arith.constant dense<0.000000e+00> : vector<2x8xf32>
    %47 = tpu.matmul %45, %46, %cst_28 {dimension_numbers = #tpu.dot_dimension_numbers<[1], [0], [0], [1], [0, 0, 1, 1], [], []>} : vector<2x8xf32>, vector<8x8xf32>, vector<2x8xf32> -> vector<2x8xf32>
    %c0_29 = arith.constant 0 : index
    %c0_30 = arith.constant 0 : index
    %48 = vector.load %arg13[%c0_29, %c0_30] : memref<1x8xf32, #tpu.memory_space<vmem>>, vector<1x8xf32>
    %49 = vector.broadcast %48 : vector<1x8xf32> to vector<2x8xf32>
    %50 = arith.addf %47, %49 : vector<2x8xf32>
    %c0_31 = arith.constant 0 : index
    %c0_32 = arith.constant 0 : index
    %51 = vector.load %arg14[%c0_31, %c0_32] : memref<2x8xf32, #tpu.memory_space<vmem>>, vector<2x8xf32>
    tpu.vector_store %arg14[%c0_31, %c0_32], %50 {strides = array<i32>} : memref<2x8xf32, #tpu.memory_space<vmem>>, vector<2x8xf32>,
    return
  }
  func.func @transform_0(%arg0: i32) -> (i32, i32) {
    %c0_i32 = arith.constant 0 : i32
    %c0_i32_0 = arith.constant 0 : i32
    return %arg0, %c0_i32 : i32, i32
  }
  func.func @transform_1(%arg0: i32) -> (i32, i32) {
    %c0_i32 = arith.constant 0 : i32
    %c0_i32_0 = arith.constant 0 : i32
    return %arg0, %c0_i32 : i32, i32
  }
  func.func @transform_2(%arg0: i32) -> (i32, i32) {
    %c0_i32 = arith.constant 0 : i32
    %c0_i32_0 = arith.constant 0 : i32
    %c0_i32_1 = arith.constant 0 : i32
    return %c0_i32, %c0_i32_0 : i32, i32
  }
  func.func @transform_3(%arg0: i32) -> (i32, i32) {
    %c0_i32 = arith.constant 0 : i32
    %c0_i32_0 = arith.constant 0 : i32
    %c0_i32_1 = arith.constant 0 : i32
    return %c0_i32, %c0_i32_0 : i32, i32
  }
  func.func @transform_4(%arg0: i32) -> (i32, i32) {
    %c0_i32 = arith.constant 0 : i32
    %c0_i32_0 = arith.constant 0 : i32
    %c0_i32_1 = arith.constant 0 : i32
    return %c0_i32, %c0_i32_0 : i32, i32
  }
  func.func @transform_5(%arg0: i32) -> (i32, i32) {
    %c0_i32 = arith.constant 0 : i32
    %c0_i32_0 = arith.constant 0 : i32
    %c0_i32_1 = arith.constant 0 : i32
    return %c0_i32, %c0_i32_0 : i32, i32
  }
  func.func @transform_6(%arg0: i32) -> (i32, i32) {
    %c0_i32 = arith.constant 0 : i32
    %c0_i32_0 = arith.constant 0 : i32
    %c0_i32_1 = arith.constant 0 : i32
    return %c0_i32, %c0_i32_0 : i32, i32
  }
  func.func @transform_7(%arg0: i32) -> (i32, i32) {
    %c0_i32 = arith.constant 0 : i32
    %c0_i32_0 = arith.constant 0 : i32
    %c0_i32_1 = arith.constant 0 : i32
    return %c0_i32, %c0_i32_0 : i32, i32
  }
  func.func @transform_8(%arg0: i32) -> (i32, i32) {
    %c0_i32 = arith.constant 0 : i32
    %c0_i32_0 = arith.constant 0 : i32
    %c0_i32_1 = arith.constant 0 : i32
    return %c0_i32, %c0_i32_0 : i32, i32
  }
  func.func @transform_9(%arg0: i32) -> (i32, i32) {
    %c0_i32 = arith.constant 0 : i32
    %c0_i32_0 = arith.constant 0 : i32
    %c0_i32_1 = arith.constant 0 : i32
    return %c0_i32, %c0_i32_0 : i32, i32
  }
  func.func @transform_10(%arg0: i32) -> (i32, i32) {
    %c0_i32 = arith.constant 0 : i32
    %c0_i32_0 = arith.constant 0 : i32
    %c0_i32_1 = arith.constant 0 : i32
    return %c0_i32, %c0_i32_0 : i32, i32
  }
  func.func @transform_11(%arg0: i32) -> (i32, i32) {
    %c0_i32 = arith.constant 0 : i32
    %c0_i32_0 = arith.constant 0 : i32
    %c0_i32_1 = arith.constant 0 : i32
    return %c0_i32, %c0_i32_0 : i32, i32
  }
  func.func @transform_12(%arg0: i32) -> (i32, i32) {
    %c0_i32 = arith.constant 0 : i32
    %c0_i32_0 = arith.constant 0 : i32
    %c0_i32_1 = arith.constant 0 : i32
    return %c0_i32, %c0_i32_0 : i32, i32
  }
  func.func @transform_13(%arg0: i32) -> (i32, i32) {
    %c0_i32 = arith.constant 0 : i32
    %c0_i32_0 = arith.constant 0 : i32
    return %arg0, %c0_i32 : i32, i32
  }
}

</mosaic_0001>

<llo_original>
// kernel: tide_forward.2
$region0: #{tide_forward.2}
  #allocation0 [shape = 'u32[]', space=smem, size = 0x4, offset = 0x4, fixed_abs, tag = 'smem constant byte address 0x4 - core index']
  #allocation1 [shape = 'u32[144,128]{1,0:T(1,128)}', space=vmem, size = 0x12000, scoped, tag = 'internal scratch']
  %s0 = inlined_call_operand.vmem [shape: f32[16,32], index: 0, kind: input, shape index: {}]
  %s1 = inlined_call_operand.vmem [shape: f32[32,130], index: 1, kind: input, shape index: {}]
  %s2 = inlined_call_operand.vmem [shape: f32[1,130], index: 2, kind: input, shape index: {}]
  %s3 = inlined_call_operand.vmem [shape: f32[128,2], index: 3, kind: input, shape index: {}]
  %s4 = inlined_call_operand.vmem [shape: f32[1,2], index: 4, kind: input, shape index: {}]
  %s5 = inlined_call_operand.vmem [shape: f32[32,160], index: 5, kind: input, shape index: {}]
  %s6 = inlined_call_operand.vmem [shape: f32[2,160], index: 6, kind: input, shape index: {}]
  %s7 = inlined_call_operand.vmem [shape: f32[1,160], index: 7, kind: input, shape index: {}]
  %s8 = inlined_call_operand.vmem [shape: f32[128,32], index: 8, kind: input, shape index: {}]
  %s9 = inlined_call_operand.vmem [shape: f32[1,32], index: 9, kind: input, shape index: {}]
  %s10 = inlined_call_operand.vmem [shape: f32[32,160], index: 10, kind: input, shape index: {}]
  %s11 = inlined_call_operand.vmem [shape: f32[1,160], index: 11, kind: input, shape index: {}]
  %s12 = inlined_call_operand.vmem [shape: f32[128,32], index: 12, kind: input, shape index: {}]
  %s13 = inlined_call_operand.vmem [shape: f32[1,32], index: 13, kind: input, shape index: {}]
  %s14 = inlined_call_operand.vmem [shape: f32[32,160], index: 14, kind: input, shape index: {}]
  %s15 = inlined_call_operand.vmem [shape: f32[1,160], index: 15, kind: input, shape index: {}]
  %s16 = inlined_call_operand.vmem [shape: f32[128,32], index: 16, kind: input, shape index: {}]
  %s17 = inlined_call_operand.vmem [shape: f32[1,32], index: 17, kind: input, shape index: {}]
  %s18 = inlined_call_operand.vmem [shape: f32[32,160], index: 18, kind: input, shape index: {}]
  %s19 = inlined_call_operand.vmem [shape: f32[1,160], index: 19, kind: input, shape index: {}]
  %s20 = inlined_call_operand.vmem [shape: f32[128,32], index: 20, kind: input, shape index: {}]
  %s21 = inlined_call_operand.vmem [shape: f32[1,32], index: 21, kind: input, shape index: {}]
  %s22 = inlined_call_operand.vmem [shape: f32[16,32], index: 22, kind: output, shape index: {}]
  %s23 = sld [smem:[#allocation0]]
  $region98: #{tide_forward.2} parent=0
    _
  %s25 = ssub.s32 1, %s23
  %s26 = scalar_select 0, %s25, %s23
  // Predicated region
  $region2: #{tide_forward.2} parent=0 // pred_check
    _
  $region3: #{tide_forward.2} parent=0 // pred_check_branch
    %28 = sbr.rel (0) target = $region5
  $region4: #{tide_forward.2} parent=0 // pred_region
    _
  $region5: #{tide_forward.2} parent=0 // pred_fallthru
    _
  // Predicated region
  $region6: #{tide_forward.2} parent=0 // pred_check
    _
  $region7: #{tide_forward.2} parent=0 // pred_check_branch
    %30 = sbr.rel (0) target = $region9
  $region8: #{tide_forward.2} parent=0 // pred_region
    _
  $region9: #{tide_forward.2} parent=0 // pred_fallthru
    _
  // Predicated region
  $region10: #{tide_forward.2} parent=0 // pred_check
    _
  $region11: #{tide_forward.2} parent=0 // pred_check_branch
    %32 = sbr.rel (0) target = $region13
  $region12: #{tide_forward.2} parent=0 // pred_region
    _
  $region13: #{tide_forward.2} parent=0 // pred_fallthru
    _
  // Predicated region
  $region14: #{tide_forward.2} parent=0 // pred_check
    _
  $region15: #{tide_forward.2} parent=0 // pred_check_branch
    %34 = sbr.rel (0) target = $region17
  $region16: #{tide_forward.2} parent=0 // pred_region
    _
  $region17: #{tide_forward.2} parent=0 // pred_fallthru
    _
  // Predicated region
  $region18: #{tide_forward.2} parent=0 // pred_check
    _
  $region19: #{tide_forward.2} parent=0 // pred_check_branch
    %36 = sbr.rel (0) target = $region21
  $region20: #{tide_forward.2} parent=0 // pred_region
    _
  $region21: #{tide_forward.2} parent=0 // pred_fallthru
    _
  // Predicated region
  $region22: #{tide_forward.2} parent=0 // pred_check
    _
  $region23: #{tide_forward.2} parent=0 // pred_check_branch
    %38 = sbr.rel (0) target = $region25
  $region24: #{tide_forward.2} parent=0 // pred_region
    _
  $region25: #{tide_forward.2} parent=0 // pred_fallthru
    _
  // Predicated region
  $region26: #{tide_forward.2} parent=0 // pred_check
    _
  $region27: #{tide_forward.2} parent=0 // pred_check_branch
    %40 = sbr.rel (0) target = $region29
  $region28: #{tide_forward.2} parent=0 // pred_region
    _
  $region29: #{tide_forward.2} parent=0 // pred_fallthru
    _
  // Predicated region
  $region30: #{tide_forward.2} parent=0 // pred_check
    _
  $region31: #{tide_forward.2} parent=0 // pred_check_branch
    %42 = sbr.rel (0) target = $region33
  $region32: #{tide_forward.2} parent=0 // pred_region
    _
  $region33: #{tide_forward.2} parent=0 // pred_fallthru
    _
  // Predicated region
  $region34: #{tide_forward.2} parent=0 // pred_check
    _
  $region35: #{tide_forward.2} parent=0 // pred_check_branch
    %44 = sbr.rel (0) target = $region37
  $region36: #{tide_forward.2} parent=0 // pred_region
    _
  $region37: #{tide_forward.2} parent=0 // pred_fallthru
    _
  // Predicated region
  $region38: #{tide_forward.2} parent=0 // pred_check
    _
  $region39: #{tide_forward.2} parent=0 // pred_check_branch
    %46 = sbr.rel (0) target = $region41
  $region40: #{tide_forward.2} parent=0 // pred_region
    _
  $region41: #{tide_forward.2} parent=0 // pred_fallthru
    _
  // Predicated region
  $region42: #{tide_forward.2} parent=0 // pred_check
    _
  $region43: #{tide_forward.2} parent=0 // pred_check_branch
    %48 = sbr.rel (0) target = $region45
  $region44: #{tide_forward.2} parent=0 // pred_region
    _
  $region45: #{tide_forward.2} parent=0 // pred_fallthru
    _
  // Predicated region
  $region46: #{tide_forward.2} parent=0 // pred_check
    _
  $region47: #{tide_forward.2} parent=0 // pred_check_branch
    %50 = sbr.rel (0) target = $region49
  $region48: #{tide_forward.2} parent=0 // pred_region
    _
  $region49: #{tide_forward.2} parent=0 // pred_fallthru
    _
  // Predicated region
  $region50: #{tide_forward.2} parent=0 // pred_check
    _
  $region51: #{tide_forward.2} parent=0 // pred_check_branch
    %52 = sbr.rel (0) target = $region53
  $region52: #{tide_forward.2} parent=0 // pred_region
    _
  $region53: #{tide_forward.2} parent=0 // pred_fallthru
    _
  // Predicated region
  $region54: #{tide_forward.2} parent=0 // pred_check
    _
  $region55: #{tide_forward.2} parent=0 // pred_check_branch
    %54 = sbr.rel (0) target = $region57
  $region56: #{tide_forward.2} parent=0 // pred_region
    _
  $region57: #{tide_forward.2} parent=0 // pred_fallthru
    _
  // Predicated region
  $region58: #{tide_forward.2} parent=0 // pred_check
    _
  $region59: #{tide_forward.2} parent=0 // pred_check_branch
    %56 = sbr.rel (0) target = $region61
  $region60: #{tide_forward.2} parent=0 // pred_region
    _
  $region61: #{tide_forward.2} parent=0 // pred_fallthru
    _
  // Predicated region
  $region62: #{tide_forward.2} parent=0 // pred_check
    _
  $region63: #{tide_forward.2} parent=0 // pred_check_branch
    %58 = sbr.rel (0) target = $region65
  $region64: #{tide_forward.2} parent=0 // pred_region
    _
  $region65: #{tide_forward.2} parent=0 // pred_fallthru
    _
  // Predicated region
  $region66: #{tide_forward.2} parent=0 // pred_check
    _
  $region67: #{tide_forward.2} parent=0 // pred_check_branch
    %60 = sbr.rel (0) target = $region69
  $region68: #{tide_forward.2} parent=0 // pred_region
    _
  $region69: #{tide_forward.2} parent=0 // pred_fallthru
    _
  // Predicated region
  $region70: #{tide_forward.2} parent=0 // pred_check
    _
  $region71: #{tide_forward.2} parent=0 // pred_check_branch
    %62 = sbr.rel (0) target = $region73
  $region72: #{tide_forward.2} parent=0 // pred_region
    _
  $region73: #{tide_forward.2} parent=0 // pred_fallthru
    _
  // Predicated region
  $region74: #{tide_forward.2} parent=0 // pred_check
    _
  $region75: #{tide_forward.2} parent=0 // pred_check_branch
    %64 = sbr.rel (0) target = $region77
  $region76: #{tide_forward.2} parent=0 // pred_region
    _
  $region77: #{tide_forward.2} parent=0 // pred_fallthru
    _
  // Predicated region
  $region78: #{tide_forward.2} parent=0 // pred_check
    _
  $region79: #{tide_forward.2} parent=0 // pred_check_branch
    %66 = sbr.rel (0) target = $region81
  $region80: #{tide_forward.2} parent=0 // pred_region
    _
  $region81: #{tide_forward.2} parent=0 // pred_fallthru
    _
  // Predicated region
  $region82: #{tide_forward.2} parent=0 // pred_check
    _
  $region83: #{tide_forward.2} parent=0 // pred_check_branch
    %68 = sbr.rel (0) target = $region85
  $region84: #{tide_forward.2} parent=0 // pred_region
    _
  $region85: #{tide_forward.2} parent=0 // pred_fallthru
    _
  // Predicated region
  $region86: #{tide_forward.2} parent=0 // pred_check
    _
  $region87: #{tide_forward.2} parent=0 // pred_check_branch
    %70 = sbr.rel (0) target = $region89
  $region88: #{tide_forward.2} parent=0 // pred_region
    _
  $region89: #{tide_forward.2} parent=0 // pred_fallthru
    _
  %v71 = vld [vmem:[%s0] sm:$0xff]
  %v72 = vld [vmem:[%s0 + $0x8] sm:$0xff]
  %v73 = vld [vmem:[%s1] sm:$0xff]
  %v74 = vld [vmem:[%s1 + $0x8] sm:$0xff]
  %v75 = vld [vmem:[%s1 + $0x10] sm:$0xff]
  %v76 = vld [vmem:[%s1 + $0x18] sm:$0xff]
  %v77 = vld [vmem:[%s1 + $0x20] sm:$0xff]
  %v78 = vld [vmem:[%s1 + $0x28] sm:$0xff]
  %v79 = vld [vmem:[%s1 + $0x30] sm:$0xff]
  %v80 = vld [vmem:[%s1 + $0x38] sm:$0xff]
  %v81 = vld [vmem:[%s2] sm:$0x3]
  %v82 = vld [vmem:[%s3] sm:$0xff]
  %v83 = vld [vmem:[%s3 + $0x8] sm:$0xff]
  %v84 = vld [vmem:[%s3 + $0x10] sm:$0xff]
  %v85 = vld [vmem:[%s3 + $0x18] sm:$0xff]
  %v86 = vld [vmem:[%s3 + $0x20] sm:$0xff]
  %v87 = vld [vmem:[%s3 + $0x28] sm:$0xff]
  %v88 = vld [vmem:[%s3 + $0x30] sm:$0xff]
  %v89 = vld [vmem:[%s3 + $0x38] sm:$0xff]
  %v90 = vld [vmem:[%s3 + $0x40] sm:$0xff]
  %v91 = vld [vmem:[%s3 + $0x48] sm:$0xff]
  %v92 = vld [vmem:[%s3 + $0x50] sm:$0xff]
  %v93 = vld [vmem:[%s3 + $0x58] sm:$0xff]
  %v94 = vld [vmem:[%s3 + $0x60] sm:$0xff]
  %v95 = vld [vmem:[%s3 + $0x68] sm:$0xff]
  %v96 = vld [vmem:[%s3 + $0x70] sm:$0xff]
  %v97 = vld [vmem:[%s3 + $0x78] sm:$0xff]
  %v98 = vld [vmem:[%s4] sm:$0x1]
  %v100 = vlaneseq
  %v101 = vshrl.u32 %v100, 7
  %v102 = vsub.s32 0, %v101
  %v103 = vrot.slane %v81, %v102
  %v104 = vlaneseq
  %v105 = vshrl.u32 %v104, 7
  %v106 = vsub.s32 1, %v105
  %v107 = vrot.slane %v81, %v106
  %vm110 = vcmask 261120
  %v112 = vsel %vm110, %v71, 0
  %v115 = vsel %vm110, %v72, 0
  %117 = vmatprep.subr.mxu0 %v74
  %118 = vmatpush1.msra.mxu0 %v73
  %119 = vmatprep.subr.mxu0 %v76
  %120 = vmatpush1.msra.mxu0 %v75
  %121 = vmatprep.subr.mxu0 %v78
  %122 = vmatpush1.msra.mxu0 %v77
  %123 = vmatprep.subr.mxu0 %v80
  %124 = vmatpush1.msra.mxu0 %v79
  %125 = vmatprep.subr.mxu0 0.0
  %126 = vmatpush1.msra.mxu0 0.0
  %127 = vmatprep.subr.mxu0 0.0
  %128 = vmatpush1.msra.mxu0 0.0
  %129 = vmatprep.subr.mxu0 0.0
  %130 = vmatpush1.msra.mxu0 0.0
  %131 = vmatprep.subr.mxu0 0.0
  %132 = vmatpush1.msra.mxu0 0.0
  %133 = vmatprep.subr.mxu0 0.0
  %134 = vmatpush1.msra.mxu0 0.0
  %135 = vmatprep.subr.mxu0 0.0
  %136 = vmatpush1.msra.mxu0 0.0
  %137 = vmatprep.subr.mxu0 0.0
  %138 = vmatpush1.msra.mxu0 0.0
  %139 = vmatprep.subr.mxu0 0.0
  %140 = vmatpush1.msra.mxu0 0.0
  %141 = vmatprep.subr.mxu0 0.0
  %142 = vmatpush1.msra.mxu0 0.0
  %143 = vmatprep.subr.mxu0 0.0
  %144 = vmatpush1.msra.mxu0 0.0
  %145 = vmatprep.subr.mxu0 0.0
  %146 = vmatpush1.msra.mxu0 0.0
  %147 = vmatprep.subr.mxu0 0.0
  %148 = vmatpush1.msra.mxu0 0.0
  %149 = vmatprep.subr.mxu0 0.0
  %150 = vmatpush1.msra.mxu0 0.0
  %151 = vmatprep.subr.mxu0 0.0
  %152 = vmatpush1.msra.mxu0 0.0
  %153 = vmatprep.subr.mxu0 0.0
  %154 = vmatpush1.msra.mxu0 0.0
  %155 = vmatprep.subr.mxu0 0.0
  %156 = vmatpush1.msra.mxu0 0.0
  %157 = vmatprep.subr.mxu0 0.0
  %158 = vmatpush1.msra.mxu0 0.0
  %159 = vmatprep.subr.mxu0 0.0
  %160 = vmatpush1.msra.mxu0 0.0
  %161 = vmatprep.subr.mxu0 0.0
  %162 = vmatpush1.msra.mxu0 0.0
  %163 = vmatprep.subr.mxu0 0.0
  %164 = vmatpush1.msra.mxu0 0.0
  %165 = vmatprep.subr.mxu0 0.0
  %166 = vmatpush1.msra.mxu0 0.0
  %167 = vmatprep.subr.mxu0 0.0
  %168 = vmatpush1.msra.mxu0 0.0
  %169 = vmatprep.subr.mxu0 0.0
  %170 = vmatpush1.msra.mxu0 0.0
  %171 = vmatprep.subr.mxu0 0.0
  %172 = vmatpush1.msra.mxu0 0.0
  %173 = vmatprep.subr.mxu0 0.0
  %174 = vmatpush1.msra.mxu0 0.0
  %175 = vmatprep.subr.mxu0 0.0
  %176 = vmatpush1.msra.mxu0 0.0
  %177 = vmatprep.subr.mxu0 0.0
  %178 = vmatpush1.msra.mxu0 0.0
  %179 = vmatprep.subr.mxu0 0.0
  %180 = vmatpush1.msra.mxu0 0.0
  %181 = vmatprep.mubr.f32.mxu0 0.0
  %182 = vmatmul.mubr.f32.gmra.mrb[0].mxu0 %v112
  %v183 = vpop.f32.mrb[0].mxu0
  %v184 = vadd.f32 %v103, %v183
  %v185 = vpop.f32.mrb[0].mxu0
  %v186 = vadd.f32 %v107, %v185
  %187 = vmatprep.mubr.f32.mxu0 0.0
  %188 = vmatmul.mubr.f32.gmra.mrb[0].mxu0 %v115
  %v189 = vpop.f32.mrb[0].mxu0
  %v190 = vadd.f32 %v103, %v189
  %v191 = vpop.f32.mrb[0].mxu0
  %v192 = vadd.f32 %v107, %v191
  %193 = vdwg.mxu0
  %v194 = vmax.f32 %v184, 0.0
  %v195 = vmax.f32 %v190, 0.0
  %v197 = vlaneseq
  %v198 = vshrl.u32 %v197, 7
  %v199 = vsub.s32 0, %v198
  %v200 = vrot.slane %v98, %v199
  %202 = vmatprep.subr.mxu0 0.0
  %203 = vmatpush1.msra.mxu0 %v82
  %204 = vmatprep.subr.mxu0 0.0
  %205 = vmatpush1.msra.mxu0 %v83
  %206 = vmatprep.subr.mxu0 0.0
  %207 = vmatpush1.msra.mxu0 %v84
  %208 = vmatprep.subr.mxu0 0.0
  %209 = vmatpush1.msra.mxu0 %v85
  %210 = vmatprep.subr.mxu0 0.0
  %211 = vmatpush1.msra.mxu0 %v86
  %212 = vmatprep.subr.mxu0 0.0
  %213 = vmatpush1.msra.mxu0 %v87
  %214 = vmatprep.subr.mxu0 0.0
  %215 = vmatpush1.msra.mxu0 %v88
  %216 = vmatprep.subr.mxu0 0.0
  %217 = vmatpush1.msra.mxu0 %v89
  %218 = vmatprep.subr.mxu0 0.0
  %219 = vmatpush1.msra.mxu0 %v90
  %220 = vmatprep.subr.mxu0 0.0
  %221 = vmatpush1.msra.mxu0 %v91
  %222 = vmatprep.subr.mxu0 0.0
  %223 = vmatpush1.msra.mxu0 %v92
  %224 = vmatprep.subr.mxu0 0.0
  %225 = vmatpush1.msra.mxu0 %v93
  %226 = vmatprep.subr.mxu0 0.0
  %227 = vmatpush1.msra.mxu0 %v94
  %228 = vmatprep.subr.mxu0 0.0
  %229 = vmatpush1.msra.mxu0 %v95
  %230 = vmatprep.subr.mxu0 0.0
  %231 = vmatpush1.msra.mxu0 %v96
  %232 = vmatprep.subr.mxu0 0.0
  %233 = vmatpush1.msra.mxu0 %v97
  %234 = vmatprep.subr.mxu0 0.0
  %235 = vmatpush1.msra.mxu0 0.0
  %236 = vmatprep.subr.mxu0 0.0
  %237 = vmatpush1.msra.mxu0 0.0
  %238 = vmatprep.subr.mxu0 0.0
  %239 = vmatpush1.msra.mxu0 0.0
  %240 = vmatprep.subr.mxu0 0.0
  %241 = vmatpush1.msra.mxu0 0.0
  %242 = vmatprep.subr.mxu0 0.0
  %243 = vmatpush1.msra.mxu0 0.0
  %244 = vmatprep.subr.mxu0 0.0
  %245 = vmatpush1.msra.mxu0 0.0
  %246 = vmatprep.subr.mxu0 0.0
  %247 = vmatpush1.msra.mxu0 0.0
  %248 = vmatprep.subr.mxu0 0.0
  %249 = vmatpush1.msra.mxu0 0.0
  %250 = vmatprep.subr.mxu0 0.0
  %251 = vmatpush1.msra.mxu0 0.0
  %252 = vmatprep.subr.mxu0 0.0
  %253 = vmatpush1.msra.mxu0 0.0
  %254 = vmatprep.subr.mxu0 0.0
  %255 = vmatpush1.msra.mxu0 0.0
  %256 = vmatprep.subr.mxu0 0.0
  %257 = vmatpush1.msra.mxu0 0.0
  %258 = vmatprep.subr.mxu0 0.0
  %259 = vmatpush1.msra.mxu0 0.0
  %260 = vmatprep.subr.mxu0 0.0
  %261 = vmatpush1.msra.mxu0 0.0
  %262 = vmatprep.subr.mxu0 0.0
  %263 = vmatpush1.msra.mxu0 0.0
  %264 = vmatprep.subr.mxu0 0.0
  %265 = vmatpush1.msra.mxu0 0.0
  %266 = vmatprep.mubr.f32.mxu0 0.0
  %267 = vmatmul.mubr.f32.gmra.mrb[0].mxu0 %v194
  %v268 = vpop.f32.mrb[0].mxu0
  %v269 = vadd.f32 %v200, %v268
  %v270 = vpop.f32.mrb[0].mxu0
  %271 = vmatprep.mubr.f32.mxu0 0.0
  %272 = vmatmul.mubr.f32.gmra.mrb[0].mxu0 %v195
  %v273 = vpop.f32.mrb[0].mxu0
  %v274 = vadd.f32 %v200, %v273
  %v275 = vpop.f32.mrb[0].mxu0
  %276 = vdwg.mxu0
  %v277 = vadd.f32 %v269, %v186
  %v278 = vadd.f32 %v274, %v192
  %v279 = vld [vmem:[%s5] sm:$0xff]
  %v280 = vld [vmem:[%s5 + $0x8] sm:$0xff]
  %v281 = vld [vmem:[%s5 + $0x10] sm:$0xff]
  %v282 = vld [vmem:[%s5 + $0x18] sm:$0xff]
  %v283 = vld [vmem:[%s5 + $0x20] sm:$0xff]
  %v284 = vld [vmem:[%s5 + $0x28] sm:$0xff]
  %v285 = vld [vmem:[%s5 + $0x30] sm:$0xff]
  %v286 = vld [vmem:[%s5 + $0x38] sm:$0xff]
  %v287 = vld [vmem:[%s6] sm:$0xf]
  %289 = vset.pattern.permute.xlu0 0
  %290 = vperm.xlu0 %289, %v277
  %v291 = vpop.permute.xlu0 %290
  %294 = vset.pattern.permute.xlu0 0
  %295 = vperm.xlu0 %294, %v278
  %v296 = vpop.permute.xlu0 %295
  %v299 = vlaneseq
  %v300 = vshrl.u32 %v299, 7
  %v301 = vsub.s32 0, %v300
  %v302 = vrot.slane %v287, %v301
  %v303 = vlaneseq
  %v304 = vshrl.u32 %v303, 7
  %v305 = vsub.s32 2, %v304
  %v306 = vrot.slane %v287, %v305
  %v309 = vlaneseq
  %v310 = vshrl.u32 %v309, 7
  %v311 = vsub.s32 0, %v310
  %v312 = vrot.slane %v302, %v311
  %v313 = vlaneseq
  %v314 = vshrl.u32 %v313, 7
  %v315 = vsub.s32 0, %v314
  %v316 = vrot.slane %v306, %v315
  %v317 = vmul.f32 %v291, %v312
  %v318 = vmul.f32 %v291, %v316
  %v319 = vmul.f32 %v296, %v312
  %v320 = vmul.f32 %v296, %v316
  %321 = vmatprep.subr.mxu0 %v280
  %322 = vmatpush1.msra.mxu0 %v279
  %323 = vmatprep.subr.mxu0 %v282
  %324 = vmatpush1.msra.mxu0 %v281
  %325 = vmatprep.subr.mxu0 %v284
  %326 = vmatpush1.msra.mxu0 %v283
  %327 = vmatprep.subr.mxu0 %v286
  %328 = vmatpush1.msra.mxu0 %v285
  %329 = vmatprep.subr.mxu0 0.0
  %330 = vmatpush1.msra.mxu0 0.0
  %331 = vmatprep.subr.mxu0 0.0
  %332 = vmatpush1.msra.mxu0 0.0
  %333 = vmatprep.subr.mxu0 0.0
  %334 = vmatpush1.msra.mxu0 0.0
  %335 = vmatprep.subr.mxu0 0.0
  %336 = vmatpush1.msra.mxu0 0.0
  %337 = vmatprep.subr.mxu0 0.0
  %338 = vmatpush1.msra.mxu0 0.0
  %339 = vmatprep.subr.mxu0 0.0
  %340 = vmatpush1.msra.mxu0 0.0
  %341 = vmatprep.subr.mxu0 0.0
  %342 = vmatpush1.msra.mxu0 0.0
  %343 = vmatprep.subr.mxu0 0.0
  %344 = vmatpush1.msra.mxu0 0.0
  %345 = vmatprep.subr.mxu0 0.0
  %346 = vmatpush1.msra.mxu0 0.0
  %347 = vmatprep.subr.mxu0 0.0
  %348 = vmatpush1.msra.mxu0 0.0
  %349 = vmatprep.subr.mxu0 0.0
  %350 = vmatpush1.msra.mxu0 0.0
  %351 = vmatprep.subr.mxu0 0.0
  %352 = vmatpush1.msra.mxu0 0.0
  %353 = vmatprep.subr.mxu0 0.0
  %354 = vmatpush1.msra.mxu0 0.0
  %355 = vmatprep.subr.mxu0 0.0
  %356 = vmatpush1.msra.mxu0 0.0
  %357 = vmatprep.subr.mxu0 0.0
  %358 = vmatpush1.msra.mxu0 0.0
  %359 = vmatprep.subr.mxu0 0.0
  %360 = vmatpush1.msra.mxu0 0.0
  %361 = vmatprep.subr.mxu0 0.0
  %362 = vmatpush1.msra.mxu0 0.0
  %363 = vmatprep.subr.mxu0 0.0
  %364 = vmatpush1.msra.mxu0 0.0
  %365 = vmatprep.subr.mxu0 0.0
  %366 = vmatpush1.msra.mxu0 0.0
  %367 = vmatprep.subr.mxu0 0.0
  %368 = vmatpush1.msra.mxu0 0.0
  %369 = vmatprep.subr.mxu0 0.0
  %370 = vmatpush1.msra.mxu0 0.0
  %371 = vmatprep.subr.mxu0 0.0
  %372 = vmatpush1.msra.mxu0 0.0
  %373 = vmatprep.subr.mxu0 0.0
  %374 = vmatpush1.msra.mxu0 0.0
  %375 = vmatprep.subr.mxu0 0.0
  %376 = vmatpush1.msra.mxu0 0.0
  %377 = vmatprep.subr.mxu0 0.0
  %378 = vmatpush1.msra.mxu0 0.0
  %379 = vmatprep.subr.mxu0 0.0
  %380 = vmatpush1.msra.mxu0 0.0
  %381 = vmatprep.subr.mxu0 0.0
  %382 = vmatpush1.msra.mxu0 0.0
  %383 = vmatprep.subr.mxu0 0.0
  %384 = vmatpush1.msra.mxu0 0.0
  %385 = vmatprep.mubr.f32.mxu0 0.0
  %386 = vmatmul.mubr.f32.gmra.mrb[0].mxu0 %v112
  %v387 = vpop.f32.mrb[0].mxu0
  %v388 = vadd.f32 %v317, %v387
  %v389 = vpop.f32.mrb[0].mxu0
  %v390 = vadd.f32 %v318, %v389
  %391 = vmatprep.mubr.f32.mxu0 0.0
  %392 = vmatmul.mubr.f32.gmra.mrb[0].mxu0 %v115
  %v393 = vpop.f32.mrb[0].mxu0
  %v394 = vadd.f32 %v319, %v393
  %v395 = vpop.f32.mrb[0].mxu0
  %v396 = vadd.f32 %v320, %v395
  %397 = vdwg.mxu0
  %398 = vset.pattern.permute.xlu0 1
  %399 = vperm.xlu0 %398, %v277
  %v400 = vpop.permute.xlu0 %399
  %402 = vset.pattern.permute.xlu0 1
  %403 = vperm.xlu0 %402, %v278
  %v404 = vpop.permute.xlu0 %403
  %v406 = vlaneseq
  %v407 = vshrl.u32 %v406, 7
  %v408 = vsub.s32 1, %v407
  %v409 = vrot.slane %v287, %v408
  %v410 = vlaneseq
  %v411 = vshrl.u32 %v410, 7
  %v412 = vsub.s32 3, %v411
  %v413 = vrot.slane %v287, %v412
  %v416 = vlaneseq
  %v417 = vshrl.u32 %v416, 7
  %v418 = vsub.s32 1, %v417
  %v419 = vrot.slane %v409, %v418
  %v420 = vlaneseq
  %v421 = vshrl.u32 %v420, 7
  %v422 = vsub.s32 1, %v421
  %v423 = vrot.slane %v413, %v422
  %v424 = vmul.f32 %v400, %v419
  %v425 = vmul.f32 %v400, %v423
  %v426 = vmul.f32 %v404, %v419
  %v427 = vmul.f32 %v404, %v423
  %v428 = vadd.f32 %v388, %v424
  %v429 = vadd.f32 %v390, %v425
  %v430 = vadd.f32 %v394, %v426
  %v431 = vadd.f32 %v396, %v427
  %v432 = vld [vmem:[%s7] sm:$0x3]
  %v434 = vlaneseq
  %v435 = vshrl.u32 %v434, 7
  %v436 = vsub.s32 0, %v435
  %v437 = vrot.slane %v432, %v436
  %v438 = vlaneseq
  %v439 = vshrl.u32 %v438, 7
  %v440 = vsub.s32 1, %v439
  %v441 = vrot.slane %v432, %v440
  %v444 = vadd.f32 %v428, %v437
  %v445 = vadd.f32 %v429, %v441
  %v446 = vadd.f32 %v430, %v437
  %v447 = vadd.f32 %v431, %v441
  %v448 = vmax.f32 %v444, 0.0
  %v449 = vmax.f32 %v446, 0.0
  %v450 = vld [vmem:[%s8] sm:$0xff]
  %v451 = vld [vmem:[%s8 + $0x8] sm:$0xff]
  %v452 = vld [vmem:[%s8 + $0x10] sm:$0xff]
  %v453 = vld [vmem:[%s8 + $0x18] sm:$0xff]
  %v454 = vld [vmem:[%s8 + $0x20] sm:$0xff]
  %v455 = vld [vmem:[%s8 + $0x28] sm:$0xff]
  %v456 = vld [vmem:[%s8 + $0x30] sm:$0xff]
  %v457 = vld [vmem:[%s8 + $0x38] sm:$0xff]
  %v458 = vld [vmem:[%s8 + $0x40] sm:$0xff]
  %v459 = vld [vmem:[%s8 + $0x48] sm:$0xff]
  %v460 = vld [vmem:[%s8 + $0x50] sm:$0xff]
  %v461 = vld [vmem:[%s8 + $0x58] sm:$0xff]
  %v462 = vld [vmem:[%s8 + $0x60] sm:$0xff]
  %v463 = vld [vmem:[%s8 + $0x68] sm:$0xff]
  %v464 = vld [vmem:[%s8 + $0x70] sm:$0xff]
  %v465 = vld [vmem:[%s8 + $0x78] sm:$0xff]
  %v466 = vld [vmem:[%s9] sm:$0x1]
  %v468 = vlaneseq
  %v469 = vshrl.u32 %v468, 7
  %v470 = vsub.s32 0, %v469
  %v471 = vrot.slane %v466, %v470
  %473 = vmatprep.subr.mxu0 0.0
  %474 = vmatpush1.msra.mxu0 %v450
  %475 = vmatprep.subr.mxu0 0.0
  %476 = vmatpush1.msra.mxu0 %v451
  %477 = vmatprep.subr.mxu0 0.0
  %478 = vmatpush1.msra.mxu0 %v452
  %479 = vmatprep.subr.mxu0 0.0
  %480 = vmatpush1.msra.mxu0 %v453
  %481 = vmatprep.subr.mxu0 0.0
  %482 = vmatpush1.msra.mxu0 %v454
  %483 = vmatprep.subr.mxu0 0.0
  %484 = vmatpush1.msra.mxu0 %v455
  %485 = vmatprep.subr.mxu0 0.0
  %486 = vmatpush1.msra.mxu0 %v456
  %487 = vmatprep.subr.mxu0 0.0
  %488 = vmatpush1.msra.mxu0 %v457
  %489 = vmatprep.subr.mxu0 0.0
  %490 = vmatpush1.msra.mxu0 %v458
  %491 = vmatprep.subr.mxu0 0.0
  %492 = vmatpush1.msra.mxu0 %v459
  %493 = vmatprep.subr.mxu0 0.0
  %494 = vmatpush1.msra.mxu0 %v460
  %495 = vmatprep.subr.mxu0 0.0
  %496 = vmatpush1.msra.mxu0 %v461
  %497 = vmatprep.subr.mxu0 0.0
  %498 = vmatpush1.msra.mxu0 %v462
  %499 = vmatprep.subr.mxu0 0.0
  %500 = vmatpush1.msra.mxu0 %v463
  %501 = vmatprep.subr.mxu0 0.0
  %502 = vmatpush1.msra.mxu0 %v464
  %503 = vmatprep.subr.mxu0 0.0
  %504 = vmatpush1.msra.mxu0 %v465
  %505 = vmatprep.subr.mxu0 0.0
  %506 = vmatpush1.msra.mxu0 0.0
  %507 = vmatprep.subr.mxu0 0.0
  %508 = vmatpush1.msra.mxu0 0.0
  %509 = vmatprep.subr.mxu0 0.0
  %510 = vmatpush1.msra.mxu0 0.0
  %511 = vmatprep.subr.mxu0 0.0
  %512 = vmatpush1.msra.mxu0 0.0
  %513 = vmatprep.subr.mxu0 0.0
  %514 = vmatpush1.msra.mxu0 0.0
  %515 = vmatprep.subr.mxu0 0.0
  %516 = vmatpush1.msra.mxu0 0.0
  %517 = vmatprep.subr.mxu0 0.0
  %518 = vmatpush1.msra.mxu0 0.0
  %519 = vmatprep.subr.mxu0 0.0
  %520 = vmatpush1.msra.mxu0 0.0
  %521 = vmatprep.subr.mxu0 0.0
  %522 = vmatpush1.msra.mxu0 0.0
  %523 = vmatprep.subr.mxu0 0.0
  %524 = vmatpush1.msra.mxu0 0.0
  %525 = vmatprep.subr.mxu0 0.0
  %526 = vmatpush1.msra.mxu0 0.0
  %527 = vmatprep.subr.mxu0 0.0
  %528 = vmatpush1.msra.mxu0 0.0
  %529 = vmatprep.subr.mxu0 0.0
  %530 = vmatpush1.msra.mxu0 0.0
  %531 = vmatprep.subr.mxu0 0.0
  %532 = vmatpush1.msra.mxu0 0.0
  %533 = vmatprep.subr.mxu0 0.0
  %534 = vmatpush1.msra.mxu0 0.0
  %535 = vmatprep.subr.mxu0 0.0
  %536 = vmatpush1.msra.mxu0 0.0
  %537 = vmatprep.mubr.f32.mxu0 0.0
  %538 = vmatmul.mubr.f32.gmra.mrb[0].mxu0 %v448
  %v539 = vpop.f32.mrb[0].mxu0
  %v540 = vadd.f32 %v471, %v539
  %v541 = vpop.f32.mrb[0].mxu0
  %542 = vmatprep.mubr.f32.mxu0 0.0
  %543 = vmatmul.mubr.f32.gmra.mrb[0].mxu0 %v449
  %v544 = vpop.f32.mrb[0].mxu0
  %v545 = vadd.f32 %v471, %v544
  %v546 = vpop.f32.mrb[0].mxu0
  %547 = vdwg.mxu0
  %v548 = vadd.f32 %v540, %v445
  %v549 = vadd.f32 %v545, %v447
  %v550 = vld [vmem:[%s10] sm:$0xff]
  %v551 = vld [vmem:[%s10 + $0x8] sm:$0xff]
  %v552 = vld [vmem:[%s10 + $0x10] sm:$0xff]
  %v553 = vld [vmem:[%s10 + $0x18] sm:$0xff]
  %v554 = vld [vmem:[%s10 + $0x20] sm:$0xff]
  %v555 = vld [vmem:[%s10 + $0x28] sm:$0xff]
  %v556 = vld [vmem:[%s10 + $0x30] sm:$0xff]
  %v557 = vld [vmem:[%s10 + $0x38] sm:$0xff]
  %v558 = vld [vmem:[%s11] sm:$0x3]
  %v559 = vld [vmem:[%s12] sm:$0xff]
  %v560 = vld [vmem:[%s12 + $0x8] sm:$0xff]
  %v561 = vld [vmem:[%s12 + $0x10] sm:$0xff]
  %v562 = vld [vmem:[%s12 + $0x18] sm:$0xff]
  %v563 = vld [vmem:[%s12 + $0x20] sm:$0xff]
  %v564 = vld [vmem:[%s12 + $0x28] sm:$0xff]
  %v565 = vld [vmem:[%s12 + $0x30] sm:$0xff]
  %v566 = vld [vmem:[%s12 + $0x38] sm:$0xff]
  %v567 = vld [vmem:[%s12 + $0x40] sm:$0xff]
  %v568 = vld [vmem:[%s12 + $0x48] sm:$0xff]
  %v569 = vld [vmem:[%s12 + $0x50] sm:$0xff]
  %v570 = vld [vmem:[%s12 + $0x58] sm:$0xff]
  %v571 = vld [vmem:[%s12 + $0x60] sm:$0xff]
  %v572 = vld [vmem:[%s12 + $0x68] sm:$0xff]
  %v573 = vld [vmem:[%s12 + $0x70] sm:$0xff]
  %v574 = vld [vmem:[%s12 + $0x78] sm:$0xff]
  %v575 = vld [vmem:[%s13] sm:$0x1]
  %v577 = vlaneseq
  %v578 = vshrl.u32 %v577, 7
  %v579 = vsub.s32 0, %v578
  %v580 = vrot.slane %v558, %v579
  %v581 = vlaneseq
  %v582 = vshrl.u32 %v581, 7
  %v583 = vsub.s32 1, %v582
  %v584 = vrot.slane %v558, %v583
  %v588 = vsel %vm110, %v548, 0
  %v591 = vsel %vm110, %v549, 0
  %593 = vmatprep.subr.mxu0 %v551
  %594 = vmatpush1.msra.mxu0 %v550
  %595 = vmatprep.subr.mxu0 %v553
  %596 = vmatpush1.msra.mxu0 %v552
  %597 = vmatprep.subr.mxu0 %v555
  %598 = vmatpush1.msra.mxu0 %v554
  %599 = vmatprep.subr.mxu0 %v557
  %600 = vmatpush1.msra.mxu0 %v556
  %601 = vmatprep.subr.mxu0 0.0
  %602 = vmatpush1.msra.mxu0 0.0
  %603 = vmatprep.subr.mxu0 0.0
  %604 = vmatpush1.msra.mxu0 0.0
  %605 = vmatprep.subr.mxu0 0.0
  %606 = vmatpush1.msra.mxu0 0.0
  %607 = vmatprep.subr.mxu0 0.0
  %608 = vmatpush1.msra.mxu0 0.0
  %609 = vmatprep.subr.mxu0 0.0
  %610 = vmatpush1.msra.mxu0 0.0
  %611 = vmatprep.subr.mxu0 0.0
  %612 = vmatpush1.msra.mxu0 0.0
  %613 = vmatprep.subr.mxu0 0.0
  %614 = vmatpush1.msra.mxu0 0.0
  %615 = vmatprep.subr.mxu0 0.0
  %616 = vmatpush1.msra.mxu0 0.0
  %617 = vmatprep.subr.mxu0 0.0
  %618 = vmatpush1.msra.mxu0 0.0
  %619 = vmatprep.subr.mxu0 0.0
  %620 = vmatpush1.msra.mxu0 0.0
  %621 = vmatprep.subr.mxu0 0.0
  %622 = vmatpush1.msra.mxu0 0.0
  %623 = vmatprep.subr.mxu0 0.0
  %624 = vmatpush1.msra.mxu0 0.0
  %625 = vmatprep.subr.mxu0 0.0
  %626 = vmatpush1.msra.mxu0 0.0
  %627 = vmatprep.subr.mxu0 0.0
  %628 = vmatpush1.msra.mxu0 0.0
  %629 = vmatprep.subr.mxu0 0.0
  %630 = vmatpush1.msra.mxu0 0.0
  %631 = vmatprep.subr.mxu0 0.0
  %632 = vmatpush1.msra.mxu0 0.0
  %633 = vmatprep.subr.mxu0 0.0
  %634 = vmatpush1.msra.mxu0 0.0
  %635 = vmatprep.subr.mxu0 0.0
  %636 = vmatpush1.msra.mxu0 0.0
  %637 = vmatprep.subr.mxu0 0.0
  %638 = vmatpush1.msra.mxu0 0.0
  %639 = vmatprep.subr.mxu0 0.0
  %640 = vmatpush1.msra.mxu0 0.0
  %641 = vmatprep.subr.mxu0 0.0
  %642 = vmatpush1.msra.mxu0 0.0
  %643 = vmatprep.subr.mxu0 0.0
  %644 = vmatpush1.msra.mxu0 0.0
  %645 = vmatprep.subr.mxu0 0.0
  %646 = vmatpush1.msra.mxu0 0.0
  %647 = vmatprep.subr.mxu0 0.0
  %648 = vmatpush1.msra.mxu0 0.0
  %649 = vmatprep.subr.mxu0 0.0
  %650 = vmatpush1.msra.mxu0 0.0
  %651 = vmatprep.subr.mxu0 0.0
  %652 = vmatpush1.msra.mxu0 0.0
  %653 = vmatprep.subr.mxu0 0.0
  %654 = vmatpush1.msra.mxu0 0.0
  %655 = vmatprep.subr.mxu0 0.0
  %656 = vmatpush1.msra.mxu0 0.0
  %657 = vmatprep.mubr.f32.mxu0 0.0
  %658 = vmatmul.mubr.f32.gmra.mrb[0].mxu0 %v588
  %v659 = vpop.f32.mrb[0].mxu0
  %v660 = vadd.f32 %v580, %v659
  %v661 = vpop.f32.mrb[0].mxu0
  %v662 = vadd.f32 %v584, %v661
  %663 = vmatprep.mubr.f32.mxu0 0.0
  %664 = vmatmul.mubr.f32.gmra.mrb[0].mxu0 %v591
  %v665 = vpop.f32.mrb[0].mxu0
  %v666 = vadd.f32 %v580, %v665
  %v667 = vpop.f32.mrb[0].mxu0
  %v668 = vadd.f32 %v584, %v667
  %669 = vdwg.mxu0
  %v670 = vmax.f32 %v660, 0.0
  %v671 = vmax.f32 %v666, 0.0
  %v673 = vlaneseq
  %v674 = vshrl.u32 %v673, 7
  %v675 = vsub.s32 0, %v674
  %v676 = vrot.slane %v575, %v675
  %678 = vmatprep.subr.mxu0 0.0
  %679 = vmatpush1.msra.mxu0 %v559
  %680 = vmatprep.subr.mxu0 0.0
  %681 = vmatpush1.msra.mxu0 %v560
  %682 = vmatprep.subr.mxu0 0.0
  %683 = vmatpush1.msra.mxu0 %v561
  %684 = vmatprep.subr.mxu0 0.0
  %685 = vmatpush1.msra.mxu0 %v562
  %686 = vmatprep.subr.mxu0 0.0
  %687 = vmatpush1.msra.mxu0 %v563
  %688 = vmatprep.subr.mxu0 0.0
  %689 = vmatpush1.msra.mxu0 %v564
  %690 = vmatprep.subr.mxu0 0.0
  %691 = vmatpush1.msra.mxu0 %v565
  %692 = vmatprep.subr.mxu0 0.0
  %693 = vmatpush1.msra.mxu0 %v566
  %694 = vmatprep.subr.mxu0 0.0
  %695 = vmatpush1.msra.mxu0 %v567
  %696 = vmatprep.subr.mxu0 0.0
  %697 = vmatpush1.msra.mxu0 %v568
  %698 = vmatprep.subr.mxu0 0.0
  %699 = vmatpush1.msra.mxu0 %v569
  %700 = vmatprep.subr.mxu0 0.0
  %701 = vmatpush1.msra.mxu0 %v570
  %702 = vmatprep.subr.mxu0 0.0
  %703 = vmatpush1.msra.mxu0 %v571
  %704 = vmatprep.subr.mxu0 0.0
  %705 = vmatpush1.msra.mxu0 %v572
  %706 = vmatprep.subr.mxu0 0.0
  %707 = vmatpush1.msra.mxu0 %v573
  %708 = vmatprep.subr.mxu0 0.0
  %709 = vmatpush1.msra.mxu0 %v574
  %710 = vmatprep.subr.mxu0 0.0
  %711 = vmatpush1.msra.mxu0 0.0
  %712 = vmatprep.subr.mxu0 0.0
  %713 = vmatpush1.msra.mxu0 0.0
  %714 = vmatprep.subr.mxu0 0.0
  %715 = vmatpush1.msra.mxu0 0.0
  %716 = vmatprep.subr.mxu0 0.0
  %717 = vmatpush1.msra.mxu0 0.0
  %718 = vmatprep.subr.mxu0 0.0
  %719 = vmatpush1.msra.mxu0 0.0
  %720 = vmatprep.subr.mxu0 0.0
  %721 = vmatpush1.msra.mxu0 0.0
  %722 = vmatprep.subr.mxu0 0.0
  %723 = vmatpush1.msra.mxu0 0.0
  %724 = vmatprep.subr.mxu0 0.0
  %725 = vmatpush1.msra.mxu0 0.0
  %726 = vmatprep.subr.mxu0 0.0
  %727 = vmatpush1.msra.mxu0 0.0
  %728 = vmatprep.subr.mxu0 0.0
  %729 = vmatpush1.msra.mxu0 0.0
  %730 = vmatprep.subr.mxu0 0.0
  %731 = vmatpush1.msra.mxu0 0.0
  %732 = vmatprep.subr.mxu0 0.0
  %733 = vmatpush1.msra.mxu0 0.0
  %734 = vmatprep.subr.mxu0 0.0
  %735 = vmatpush1.msra.mxu0 0.0
  %736 = vmatprep.subr.mxu0 0.0
  %737 = vmatpush1.msra.mxu0 0.0
  %738 = vmatprep.subr.mxu0 0.0
  %739 = vmatpush1.msra.mxu0 0.0
  %740 = vmatprep.subr.mxu0 0.0
  %741 = vmatpush1.msra.mxu0 0.0
  %742 = vmatprep.mubr.f32.mxu0 0.0
  %743 = vmatmul.mubr.f32.gmra.mrb[0].mxu0 %v670
  %v744 = vpop.f32.mrb[0].mxu0
  %v745 = vadd.f32 %v676, %v744
  %v746 = vpop.f32.mrb[0].mxu0
  %747 = vmatprep.mubr.f32.mxu0 0.0
  %748 = vmatmul.mubr.f32.gmra.mrb[0].mxu0 %v671
  %v749 = vpop.f32.mrb[0].mxu0
  %v750 = vadd.f32 %v676, %v749
  %v751 = vpop.f32.mrb[0].mxu0
  %752 = vdwg.mxu0
  %v753 = vadd.f32 %v745, %v662
  %v754 = vadd.f32 %v750, %v668
  %v755 = vld [vmem:[%s14] sm:$0xff]
  %v756 = vld [vmem:[%s14 + $0x8] sm:$0xff]
  %v757 = vld [vmem:[%s14 + $0x10] sm:$0xff]
  %v758 = vld [vmem:[%s14 + $0x18] sm:$0xff]
  %v759 = vld [vmem:[%s14 + $0x20] sm:$0xff]
  %v760 = vld [vmem:[%s14 + $0x28] sm:$0xff]
  %v761 = vld [vmem:[%s14 + $0x30] sm:$0xff]
  %v762 = vld [vmem:[%s14 + $0x38] sm:$0xff]
  %v763 = vld [vmem:[%s15] sm:$0x3]
  %v764 = vld [vmem:[%s16] sm:$0xff]
  %v765 = vld [vmem:[%s16 + $0x8] sm:$0xff]
  %v766 = vld [vmem:[%s16 + $0x10] sm:$0xff]
  %v767 = vld [vmem:[%s16 + $0x18] sm:$0xff]
  %v768 = vld [vmem:[%s16 + $0x20] sm:$0xff]
  %v769 = vld [vmem:[%s16 + $0x28] sm:$0xff]
  %v770 = vld [vmem:[%s16 + $0x30] sm:$0xff]
  %v771 = vld [vmem:[%s16 + $0x38] sm:$0xff]
  %v772 = vld [vmem:[%s16 + $0x40] sm:$0xff]
  %v773 = vld [vmem:[%s16 + $0x48] sm:$0xff]
  %v774 = vld [vmem:[%s16 + $0x50] sm:$0xff]
  %v775 = vld [vmem:[%s16 + $0x58] sm:$0xff]
  %v776 = vld [vmem:[%s16 + $0x60] sm:$0xff]
  %v777 = vld [vmem:[%s16 + $0x68] sm:$0xff]
  %v778 = vld [vmem:[%s16 + $0x70] sm:$0xff]
  %v779 = vld [vmem:[%s16 + $0x78] sm:$0xff]
  %v780 = vld [vmem:[%s17] sm:$0x1]
  %v782 = vlaneseq
  %v783 = vshrl.u32 %v782, 7
  %v784 = vsub.s32 0, %v783
  %v785 = vrot.slane %v763, %v784
  %v786 = vlaneseq
  %v787 = vshrl.u32 %v786, 7
  %v788 = vsub.s32 1, %v787
  %v789 = vrot.slane %v763, %v788
  %v793 = vsel %vm110, %v753, 0
  %v796 = vsel %vm110, %v754, 0
  %798 = vmatprep.subr.mxu0 %v756
  %799 = vmatpush1.msra.mxu0 %v755
  %800 = vmatprep.subr.mxu0 %v758
  %801 = vmatpush1.msra.mxu0 %v757
  %802 = vmatprep.subr.mxu0 %v760
  %803 = vmatpush1.msra.mxu0 %v759
  %804 = vmatprep.subr.mxu0 %v762
  %805 = vmatpush1.msra.mxu0 %v761
  %806 = vmatprep.subr.mxu0 0.0
  %807 = vmatpush1.msra.mxu0 0.0
  %808 = vmatprep.subr.mxu0 0.0
  %809 = vmatpush1.msra.mxu0 0.0
  %810 = vmatprep.subr.mxu0 0.0
  %811 = vmatpush1.msra.mxu0 0.0
  %812 = vmatprep.subr.mxu0 0.0
  %813 = vmatpush1.msra.mxu0 0.0
  %814 = vmatprep.subr.mxu0 0.0
  %815 = vmatpush1.msra.mxu0 0.0
  %816 = vmatprep.subr.mxu0 0.0
  %817 = vmatpush1.msra.mxu0 0.0
  %818 = vmatprep.subr.mxu0 0.0
  %819 = vmatpush1.msra.mxu0 0.0
  %820 = vmatprep.subr.mxu0 0.0
  %821 = vmatpush1.msra.mxu0 0.0
  %822 = vmatprep.subr.mxu0 0.0
  %823 = vmatpush1.msra.mxu0 0.0
  %824 = vmatprep.subr.mxu0 0.0
  %825 = vmatpush1.msra.mxu0 0.0
  %826 = vmatprep.subr.mxu0 0.0
  %827 = vmatpush1.msra.mxu0 0.0
  %828 = vmatprep.subr.mxu0 0.0
  %829 = vmatpush1.msra.mxu0 0.0
  %830 = vmatprep.subr.mxu0 0.0
  %831 = vmatpush1.msra.mxu0 0.0
  %832 = vmatprep.subr.mxu0 0.0
  %833 = vmatpush1.msra.mxu0 0.0
  %834 = vmatprep.subr.mxu0 0.0
  %835 = vmatpush1.msra.mxu0 0.0
  %836 = vmatprep.subr.mxu0 0.0
  %837 = vmatpush1.msra.mxu0 0.0
  %838 = vmatprep.subr.mxu0 0.0
  %839 = vmatpush1.msra.mxu0 0.0
  %840 = vmatprep.subr.mxu0 0.0
  %841 = vmatpush1.msra.mxu0 0.0
  %842 = vmatprep.subr.mxu0 0.0
  %843 = vmatpush1.msra.mxu0 0.0
  %844 = vmatprep.subr.mxu0 0.0
  %845 = vmatpush1.msra.mxu0 0.0
  %846 = vmatprep.subr.mxu0 0.0
  %847 = vmatpush1.msra.mxu0 0.0
  %848 = vmatprep.subr.mxu0 0.0
  %849 = vmatpush1.msra.mxu0 0.0
  %850 = vmatprep.subr.mxu0 0.0
  %851 = vmatpush1.msra.mxu0 0.0
  %852 = vmatprep.subr.mxu0 0.0
  %853 = vmatpush1.msra.mxu0 0.0
  %854 = vmatprep.subr.mxu0 0.0
  %855 = vmatpush1.msra.mxu0 0.0
  %856 = vmatprep.subr.mxu0 0.0
  %857 = vmatpush1.msra.mxu0 0.0
  %858 = vmatprep.subr.mxu0 0.0
  %859 = vmatpush1.msra.mxu0 0.0
  %860 = vmatprep.subr.mxu0 0.0
  %861 = vmatpush1.msra.mxu0 0.0
  %862 = vmatprep.mubr.f32.mxu0 0.0
  %863 = vmatmul.mubr.f32.gmra.mrb[0].mxu0 %v793
  %v864 = vpop.f32.mrb[0].mxu0
  %v865 = vadd.f32 %v785, %v864
  %v866 = vpop.f32.mrb[0].mxu0
  %v867 = vadd.f32 %v789, %v866
  %868 = vmatprep.mubr.f32.mxu0 0.0
  %869 = vmatmul.mubr.f32.gmra.mrb[0].mxu0 %v796
  %v870 = vpop.f32.mrb[0].mxu0
  %v871 = vadd.f32 %v785, %v870
  %v872 = vpop.f32.mrb[0].mxu0
  %v873 = vadd.f32 %v789, %v872
  %874 = vdwg.mxu0
  %v875 = vmax.f32 %v865, 0.0
  %v876 = vmax.f32 %v871, 0.0
  %v878 = vlaneseq
  %v879 = vshrl.u32 %v878, 7
  %v880 = vsub.s32 0, %v879
  %v881 = vrot.slane %v780, %v880
  %883 = vmatprep.subr.mxu0 0.0
  %884 = vmatpush1.msra.mxu0 %v764
  %885 = vmatprep.subr.mxu0 0.0
  %886 = vmatpush1.msra.mxu0 %v765
  %887 = vmatprep.subr.mxu0 0.0
  %888 = vmatpush1.msra.mxu0 %v766
  %889 = vmatprep.subr.mxu0 0.0
  %890 = vmatpush1.msra.mxu0 %v767
  %891 = vmatprep.subr.mxu0 0.0
  %892 = vmatpush1.msra.mxu0 %v768
  %893 = vmatprep.subr.mxu0 0.0
  %894 = vmatpush1.msra.mxu0 %v769
  %895 = vmatprep.subr.mxu0 0.0
  %896 = vmatpush1.msra.mxu0 %v770
  %897 = vmatprep.subr.mxu0 0.0
  %898 = vmatpush1.msra.mxu0 %v771
  %899 = vmatprep.subr.mxu0 0.0
  %900 = vmatpush1.msra.mxu0 %v772
  %901 = vmatprep.subr.mxu0 0.0
  %902 = vmatpush1.msra.mxu0 %v773
  %903 = vmatprep.subr.mxu0 0.0
  %904 = vmatpush1.msra.mxu0 %v774
  %905 = vmatprep.subr.mxu0 0.0
  %906 = vmatpush1.msra.mxu0 %v775
  %907 = vmatprep.subr.mxu0 0.0
  %908 = vmatpush1.msra.mxu0 %v776
  %909 = vmatprep.subr.mxu0 0.0
  %910 = vmatpush1.msra.mxu0 %v777
  %911 = vmatprep.subr.mxu0 0.0
  %912 = vmatpush1.msra.mxu0 %v778
  %913 = vmatprep.subr.mxu0 0.0
  %914 = vmatpush1.msra.mxu0 %v779
  %915 = vmatprep.subr.mxu0 0.0
  %916 = vmatpush1.msra.mxu0 0.0
  %917 = vmatprep.subr.mxu0 0.0
  %918 = vmatpush1.msra.mxu0 0.0
  %919 = vmatprep.subr.mxu0 0.0
  %920 = vmatpush1.msra.mxu0 0.0
  %921 = vmatprep.subr.mxu0 0.0
  %922 = vmatpush1.msra.mxu0 0.0
  %923 = vmatprep.subr.mxu0 0.0
  %924 = vmatpush1.msra.mxu0 0.0
  %925 = vmatprep.subr.mxu0 0.0
  %926 = vmatpush1.msra.mxu0 0.0
  %927 = vmatprep.subr.mxu0 0.0
  %928 = vmatpush1.msra.mxu0 0.0
  %929 = vmatprep.subr.mxu0 0.0
  %930 = vmatpush1.msra.mxu0 0.0
  %931 = vmatprep.subr.mxu0 0.0
  %932 = vmatpush1.msra.mxu0 0.0
  %933 = vmatprep.subr.mxu0 0.0
  %934 = vmatpush1.msra.mxu0 0.0
  %935 = vmatprep.subr.mxu0 0.0
  %936 = vmatpush1.msra.mxu0 0.0
  %937 = vmatprep.subr.mxu0 0.0
  %938 = vmatpush1.msra.mxu0 0.0
  %939 = vmatprep.subr.mxu0 0.0
  %940 = vmatpush1.msra.mxu0 0.0
  %941 = vmatprep.subr.mxu0 0.0
  %942 = vmatpush1.msra.mxu0 0.0
  %943 = vmatprep.subr.mxu0 0.0
  %944 = vmatpush1.msra.mxu0 0.0
  %945 = vmatprep.subr.mxu0 0.0
  %946 = vmatpush1.msra.mxu0 0.0
  %947 = vmatprep.mubr.f32.mxu0 0.0
  %948 = vmatmul.mubr.f32.gmra.mrb[0].mxu0 %v875
  %v949 = vpop.f32.mrb[0].mxu0
  %v950 = vadd.f32 %v881, %v949
  %v951 = vpop.f32.mrb[0].mxu0
  %952 = vmatprep.mubr.f32.mxu0 0.0
  %953 = vmatmul.mubr.f32.gmra.mrb[0].mxu0 %v876
  %v954 = vpop.f32.mrb[0].mxu0
  %v955 = vadd.f32 %v881, %v954
  %v956 = vpop.f32.mrb[0].mxu0
  %957 = vdwg.mxu0
  %v958 = vadd.f32 %v950, %v867
  %v959 = vadd.f32 %v955, %v873
  %v960 = vld [vmem:[%s18] sm:$0xff]
  %v961 = vld [vmem:[%s18 + $0x8] sm:$0xff]
  %v962 = vld [vmem:[%s18 + $0x10] sm:$0xff]
  %v963 = vld [vmem:[%s18 + $0x18] sm:$0xff]
  %v964 = vld [vmem:[%s18 + $0x20] sm:$0xff]
  %v965 = vld [vmem:[%s18 + $0x28] sm:$0xff]
  %v966 = vld [vmem:[%s18 + $0x30] sm:$0xff]
  %v967 = vld [vmem:[%s18 + $0x38] sm:$0xff]
  %v968 = vld [vmem:[%s19] sm:$0x3]
  %v969 = vld [vmem:[%s20] sm:$0xff]
  %v970 = vld [vmem:[%s20 + $0x8] sm:$0xff]
  %v971 = vld [vmem:[%s20 + $0x10] sm:$0xff]
  %v972 = vld [vmem:[%s20 + $0x18] sm:$0xff]
  %v973 = vld [vmem:[%s20 + $0x20] sm:$0xff]
  %v974 = vld [vmem:[%s20 + $0x28] sm:$0xff]
  %v975 = vld [vmem:[%s20 + $0x30] sm:$0xff]
  %v976 = vld [vmem:[%s20 + $0x38] sm:$0xff]
  %v977 = vld [vmem:[%s20 + $0x40] sm:$0xff]
  %v978 = vld [vmem:[%s20 + $0x48] sm:$0xff]
  %v979 = vld [vmem:[%s20 + $0x50] sm:$0xff]
  %v980 = vld [vmem:[%s20 + $0x58] sm:$0xff]
  %v981 = vld [vmem:[%s20 + $0x60] sm:$0xff]
  %v982 = vld [vmem:[%s20 + $0x68] sm:$0xff]
  %v983 = vld [vmem:[%s20 + $0x70] sm:$0xff]
  %v984 = vld [vmem:[%s20 + $0x78] sm:$0xff]
  %v985 = vld [vmem:[%s21] sm:$0x1]
  %v987 = vlaneseq
  %v988 = vshrl.u32 %v987, 7
  %v989 = vsub.s32 0, %v988
  %v990 = vrot.slane %v968, %v989
  %v991 = vlaneseq
  %v992 = vshrl.u32 %v991, 7
  %v993 = vsub.s32 1, %v992
  %v994 = vrot.slane %v968, %v993
  %v998 = vsel %vm110, %v958, 0
  %v1001 = vsel %vm110, %v959, 0
  %1003 = vmatprep.subr.mxu0 %v961
  %1004 = vmatpush1.msra.mxu0 %v960
  %1005 = vmatprep.subr.mxu0 %v963
  %1006 = vmatpush1.msra.mxu0 %v962
  %1007 = vmatprep.subr.mxu0 %v965
  %1008 = vmatpush1.msra.mxu0 %v964
  %1009 = vmatprep.subr.mxu0 %v967
  %1010 = vmatpush1.msra.mxu0 %v966
  %1011 = vmatprep.subr.mxu0 0.0
  %1012 = vmatpush1.msra.mxu0 0.0
  %1013 = vmatprep.subr.mxu0 0.0
  %1014 = vmatpush1.msra.mxu0 0.0
  %1015 = vmatprep.subr.mxu0 0.0
  %1016 = vmatpush1.msra.mxu0 0.0
  %1017 = vmatprep.subr.mxu0 0.0
  %1018 = vmatpush1.msra.mxu0 0.0
  %1019 = vmatprep.subr.mxu0 0.0
  %1020 = vmatpush1.msra.mxu0 0.0
  %1021 = vmatprep.subr.mxu0 0.0
  %1022 = vmatpush1.msra.mxu0 0.0
  %1023 = vmatprep.subr.mxu0 0.0
  %1024 = vmatpush1.msra.mxu0 0.0
  %1025 = vmatprep.subr.mxu0 0.0
  %1026 = vmatpush1.msra.mxu0 0.0
  %1027 = vmatprep.subr.mxu0 0.0
  %1028 = vmatpush1.msra.mxu0 0.0
  %1029 = vmatprep.subr.mxu0 0.0
  %1030 = vmatpush1.msra.mxu0 0.0
  %1031 = vmatprep.subr.mxu0 0.0
  %1032 = vmatpush1.msra.mxu0 0.0
  %1033 = vmatprep.subr.mxu0 0.0
  %1034 = vmatpush1.msra.mxu0 0.0
  %1035 = vmatprep.subr.mxu0 0.0
  %1036 = vmatpush1.msra.mxu0 0.0
  %1037 = vmatprep.subr.mxu0 0.0
  %1038 = vmatpush1.msra.mxu0 0.0
  %1039 = vmatprep.subr.mxu0 0.0
  %1040 = vmatpush1.msra.mxu0 0.0
  %1041 = vmatprep.subr.mxu0 0.0
  %1042 = vmatpush1.msra.mxu0 0.0
  %1043 = vmatprep.subr.mxu0 0.0
  %1044 = vmatpush1.msra.mxu0 0.0
  %1045 = vmatprep.subr.mxu0 0.0
  %1046 = vmatpush1.msra.mxu0 0.0
  %1047 = vmatprep.subr.mxu0 0.0
  %1048 = vmatpush1.msra.mxu0 0.0
  %1049 = vmatprep.subr.mxu0 0.0
  %1050 = vmatpush1.msra.mxu0 0.0
  %1051 = vmatprep.subr.mxu0 0.0
  %1052 = vmatpush1.msra.mxu0 0.0
  %1053 = vmatprep.subr.mxu0 0.0
  %1054 = vmatpush1.msra.mxu0 0.0
  %1055 = vmatprep.subr.mxu0 0.0
  %1056 = vmatpush1.msra.mxu0 0.0
  %1057 = vmatprep.subr.mxu0 0.0
  %1058 = vmatpush1.msra.mxu0 0.0
  %1059 = vmatprep.subr.mxu0 0.0
  %1060 = vmatpush1.msra.mxu0 0.0
  %1061 = vmatprep.subr.mxu0 0.0
  %1062 = vmatpush1.msra.mxu0 0.0
  %1063 = vmatprep.subr.mxu0 0.0
  %1064 = vmatpush1.msra.mxu0 0.0
  %1065 = vmatprep.subr.mxu0 0.0
  %1066 = vmatpush1.msra.mxu0 0.0
  %1067 = vmatprep.mubr.f32.mxu0 0.0
  %1068 = vmatmul.mubr.f32.gmra.mrb[0].mxu0 %v998
  %v1069 = vpop.f32.mrb[0].mxu0
  %v1070 = vadd.f32 %v990, %v1069
  %v1071 = vpop.f32.mrb[0].mxu0
  %v1072 = vadd.f32 %v994, %v1071
  %1073 = vmatprep.mubr.f32.mxu0 0.0
  %1074 = vmatmul.mubr.f32.gmra.mrb[0].mxu0 %v1001
  %v1075 = vpop.f32.mrb[0].mxu0
  %v1076 = vadd.f32 %v990, %v1075
  %v1077 = vpop.f32.mrb[0].mxu0
  %v1078 = vadd.f32 %v994, %v1077
  %1079 = vdwg.mxu0
  %v1080 = vmax.f32 %v1070, 0.0
  %v1081 = vmax.f32 %v1076, 0.0
  %v1083 = vlaneseq
  %v1084 = vshrl.u32 %v1083, 7
  %v1085 = vsub.s32 0, %v1084
  %v1086 = vrot.slane %v985, %v1085
  %1088 = vmatprep.subr.mxu0 0.0
  %1089 = vmatpush1.msra.mxu0 %v969
  %1090 = vmatprep.subr.mxu0 0.0
  %1091 = vmatpush1.msra.mxu0 %v970
  %1092 = vmatprep.subr.mxu0 0.0
  %1093 = vmatpush1.msra.mxu0 %v971
  %1094 = vmatprep.subr.mxu0 0.0
  %1095 = vmatpush1.msra.mxu0 %v972
  %1096 = vmatprep.subr.mxu0 0.0
  %1097 = vmatpush1.msra.mxu0 %v973
  %1098 = vmatprep.subr.mxu0 0.0
  %1099 = vmatpush1.msra.mxu0 %v974
  %1100 = vmatprep.subr.mxu0 0.0
  %1101 = vmatpush1.msra.mxu0 %v975
  %1102 = vmatprep.subr.mxu0 0.0
  %1103 = vmatpush1.msra.mxu0 %v976
  %1104 = vmatprep.subr.mxu0 0.0
  %1105 = vmatpush1.msra.mxu0 %v977
  %1106 = vmatprep.subr.mxu0 0.0
  %1107 = vmatpush1.msra.mxu0 %v978
  %1108 = vmatprep.subr.mxu0 0.0
  %1109 = vmatpush1.msra.mxu0 %v979
  %1110 = vmatprep.subr.mxu0 0.0
  %1111 = vmatpush1.msra.mxu0 %v980
  %1112 = vmatprep.subr.mxu0 0.0
  %1113 = vmatpush1.msra.mxu0 %v981
  %1114 = vmatprep.subr.mxu0 0.0
  %1115 = vmatpush1.msra.mxu0 %v982
  %1116 = vmatprep.subr.mxu0 0.0
  %1117 = vmatpush1.msra.mxu0 %v983
  %1118 = vmatprep.subr.mxu0 0.0
  %1119 = vmatpush1.msra.mxu0 %v984
  %1120 = vmatprep.subr.mxu0 0.0
  %1121 = vmatpush1.msra.mxu0 0.0
  %1122 = vmatprep.subr.mxu0 0.0
  %1123 = vmatpush1.msra.mxu0 0.0
  %1124 = vmatprep.subr.mxu0 0.0
  %1125 = vmatpush1.msra.mxu0 0.0
  %1126 = vmatprep.subr.mxu0 0.0
  %1127 = vmatpush1.msra.mxu0 0.0
  %1128 = vmatprep.subr.mxu0 0.0
  %1129 = vmatpush1.msra.mxu0 0.0
  %1130 = vmatprep.subr.mxu0 0.0
  %1131 = vmatpush1.msra.mxu0 0.0
  %1132 = vmatprep.subr.mxu0 0.0
  %1133 = vmatpush1.msra.mxu0 0.0
  %1134 = vmatprep.subr.mxu0 0.0
  %1135 = vmatpush1.msra.mxu0 0.0
  %1136 = vmatprep.subr.mxu0 0.0
  %1137 = vmatpush1.msra.mxu0 0.0
  %1138 = vmatprep.subr.mxu0 0.0
  %1139 = vmatpush1.msra.mxu0 0.0
  %1140 = vmatprep.subr.mxu0 0.0
  %1141 = vmatpush1.msra.mxu0 0.0
  %1142 = vmatprep.subr.mxu0 0.0
  %1143 = vmatpush1.msra.mxu0 0.0
  %1144 = vmatprep.subr.mxu0 0.0
  %1145 = vmatpush1.msra.mxu0 0.0
  %1146 = vmatprep.subr.mxu0 0.0
  %1147 = vmatpush1.msra.mxu0 0.0
  %1148 = vmatprep.subr.mxu0 0.0
  %1149 = vmatpush1.msra.mxu0 0.0
  %1150 = vmatprep.subr.mxu0 0.0
  %1151 = vmatpush1.msra.mxu0 0.0
  %1152 = vmatprep.mubr.f32.mxu0 0.0
  %1153 = vmatmul.mubr.f32.gmra.mrb[0].mxu0 %v1080
  %v1154 = vpop.f32.mrb[0].mxu0
  %v1155 = vadd.f32 %v1086, %v1154
  %v1156 = vpop.f32.mrb[0].mxu0
  %1157 = vmatprep.mubr.f32.mxu0 0.0
  %1158 = vmatmul.mubr.f32.gmra.mrb[0].mxu0 %v1081
  %v1159 = vpop.f32.mrb[0].mxu0
  %v1160 = vadd.f32 %v1086, %v1159
  %v1161 = vpop.f32.mrb[0].mxu0
  %1162 = vdwg.mxu0
  %v1163 = vadd.f32 %v1155, %v1072
  %v1164 = vadd.f32 %v1160, %v1078
  %1165 = vst.msk [vmem:[%s22] sm:$0xff] %vm110, %v1163
  %1166 = vst.msk [vmem:[%s22 + $0x8] sm:$0xff] %vm110, %v1164
  // Predicated region
  $region90: #{tide_forward.2} parent=0 // pred_check
    _
  $region91: #{tide_forward.2} parent=0 // pred_check_branch
    %1168 = sbr.rel (0) target = $region93
  $region92: #{tide_forward.2} parent=0 // pred_region
    _
  $region93: #{tide_forward.2} parent=0 // pred_fallthru
    _
  // Predicated region
  $region94: #{tide_forward.2} parent=0 // pred_check
    _
  $region95: #{tide_forward.2} parent=0 // pred_check_branch
    %1170 = sbr.rel (0) target = $region97
  $region96: #{tide_forward.2} parent=0 // pred_region
    _
  $region97: #{tide_forward.2} parent=0 // pred_fallthru
    _

// kernel: tide_forward.3
$region0: #{tide_forward.3}
  #allocation0 [shape = 'u32[]', space=smem, size = 0x4, offset = 0x4, fixed_abs, tag = 'smem constant byte address 0x4 - core index']
  #allocation1 [shape = 'u32[144,128]{1,0:T(1,128)}', space=vmem, size = 0x12000, scoped, tag = 'internal scratch']
  #allocation2 [shape = 'f32[1,1]{1,0:T(1,128)S(1)}', space=vmem, size = 0x200, scoped, tag = 'scoped memory for tide_forward.3']
  %s0 = inlined_call_operand.vmem [shape: f32[16,32], index: 0, kind: input, shape index: {}]
  %s1 = inlined_call_operand.vmem [shape: f32[16,32], index: 1, kind: input, shape index: {}]
  %s2 = inlined_call_operand.vmem [shape: f32[32,130], index: 2, kind: input, shape index: {}]
  %s3 = inlined_call_operand.vmem [shape: f32[1,130], index: 3, kind: input, shape index: {}]
  %s4 = inlined_call_operand.vmem [shape: f32[128,2], index: 4, kind: input, shape index: {}]
  %s5 = inlined_call_operand.vmem [shape: f32[1,2], index: 5, kind: input, shape index: {}]
  %s6 = inlined_call_operand.vmem [shape: f32[2,129], index: 6, kind: input, shape index: {}]
  %s7 = inlined_call_operand.vmem [shape: f32[32,129], index: 7, kind: input, shape index: {}]
  %s8 = inlined_call_operand.vmem [shape: f32[1,129], index: 8, kind: input, shape index: {}]
  %s9 = inlined_call_operand.vmem [shape: f32[128,1], index: 9, kind: input, shape index: {}]
  %s10 = inlined_call_operand.<no memory space> [shape: f32[1,1], index: 10, kind: input, shape index: {}]
  %s11 = inlined_call_operand.vmem [shape: f32[8,8], index: 11, kind: input, shape index: {}]
  %s12 = inlined_call_operand.vmem [shape: f32[1,8], index: 12, kind: input, shape index: {}]
  %s13 = inlined_call_operand.hbm [shape: f32[2,8], index: 13, kind: output, shape index: {}]
  %s14 = sld [smem:[#allocation0]]
  $region62: #{tide_forward.3} parent=0
    _
  %s16 = ssub.s32 1, %s14
  %s17 = scalar_select 0, %s16, %s14
  %v18 = vstv %s10
  %19 = vst [vmem:[#allocation2] sm:$0x1] %v18
  $region1: #{tide_forward.3} parent=0
    #allocation3 [shape = 'u8[1024]{0}', space=vmem, size = 0x400, scoped, tag = 'output window, operand 0, single buffered']
    #allocation4 [shape = 's32[1]{0}', space=sflag, size = 0x4, scoped, tag = 'scoped memory for tide_forward.3']
    %20 = vsyncpa [#allocation4], 0
    // Predicated region
    $region2: #{tide_forward.3} parent=1 // pred_check
      _
    $region3: #{tide_forward.3} parent=1 // pred_check_branch
      %22 = sbr.rel (0) target = $region5
    $region4: #{tide_forward.3} parent=1 // pred_region
      _
    $region5: #{tide_forward.3} parent=1 // pred_fallthru
      _
    // Predicated region
    $region6: #{tide_forward.3} parent=1 // pred_check
      _
    $region7: #{tide_forward.3} parent=1 // pred_check_branch
      %24 = sbr.rel (0) target = $region9
    $region8: #{tide_forward.3} parent=1 // pred_region
      _
    $region9: #{tide_forward.3} parent=1 // pred_fallthru
      _
    // Predicated region
    $region10: #{tide_forward.3} parent=1 // pred_check
      _
    $region11: #{tide_forward.3} parent=1 // pred_check_branch
      %26 = sbr.rel (0) target = $region13
    $region12: #{tide_forward.3} parent=1 // pred_region
      _
    $region13: #{tide_forward.3} parent=1 // pred_fallthru
      _
    // Predicated region
    $region14: #{tide_forward.3} parent=1 // pred_check
      _
    $region15: #{tide_forward.3} parent=1 // pred_check_branch
      %28 = sbr.rel (0) target = $region17
    $region16: #{tide_forward.3} parent=1 // pred_region
      _
    $region17: #{tide_forward.3} parent=1 // pred_fallthru
      _
    // Predicated region
    $region18: #{tide_forward.3} parent=1 // pred_check
      _
    $region19: #{tide_forward.3} parent=1 // pred_check_branch
      %30 = sbr.rel (0) target = $region21
    $region20: #{tide_forward.3} parent=1 // pred_region
      _
    $region21: #{tide_forward.3} parent=1 // pred_fallthru
      _
    // Predicated region
    $region22: #{tide_forward.3} parent=1 // pred_check
      _
    $region23: #{tide_forward.3} parent=1 // pred_check_branch
      %32 = sbr.rel (0) target = $region25
    $region24: #{tide_forward.3} parent=1 // pred_region
      _
    $region25: #{tide_forward.3} parent=1 // pred_fallthru
      _
    // Predicated region
    $region26: #{tide_forward.3} parent=1 // pred_check
      _
    $region27: #{tide_forward.3} parent=1 // pred_check_branch
      %34 = sbr.rel (0) target = $region29
    $region28: #{tide_forward.3} parent=1 // pred_region
      _
    $region29: #{tide_forward.3} parent=1 // pred_fallthru
      _
    // Predicated region
    $region30: #{tide_forward.3} parent=1 // pred_check
      _
    $region31: #{tide_forward.3} parent=1 // pred_check_branch
      %36 = sbr.rel (0) target = $region33
    $region32: #{tide_forward.3} parent=1 // pred_region
      _
    $region33: #{tide_forward.3} parent=1 // pred_fallthru
      _
    // Predicated region
    $region34: #{tide_forward.3} parent=1 // pred_check
      _
    $region35: #{tide_forward.3} parent=1 // pred_check_branch
      %38 = sbr.rel (0) target = $region37
    $region36: #{tide_forward.3} parent=1 // pred_region
      _
    $region37: #{tide_forward.3} parent=1 // pred_fallthru
      _
    // Predicated region
    $region38: #{tide_forward.3} parent=1 // pred_check
      _
    $region39: #{tide_forward.3} parent=1 // pred_check_branch
      %40 = sbr.rel (0) target = $region41
    $region40: #{tide_forward.3} parent=1 // pred_region
      _
    $region41: #{tide_forward.3} parent=1 // pred_fallthru
      _
    // Predicated region
    $region42: #{tide_forward.3} parent=1 // pred_check
      _
    $region43: #{tide_forward.3} parent=1 // pred_check_branch
      %42 = sbr.rel (0) target = $region45
    $region44: #{tide_forward.3} parent=1 // pred_region
      _
    $region45: #{tide_forward.3} parent=1 // pred_fallthru
      _
    // Predicated region
    $region46: #{tide_forward.3} parent=1 // pred_check
      _
    $region47: #{tide_forward.3} parent=1 // pred_check_branch
      %44 = sbr.rel (0) target = $region49
    $region48: #{tide_forward.3} parent=1 // pred_region
      _
    $region49: #{tide_forward.3} parent=1 // pred_fallthru
      _
    // Predicated region
    $region50: #{tide_forward.3} parent=1 // pred_check
      _
    $region51: #{tide_forward.3} parent=1 // pred_check_branch
      %46 = sbr.rel (0) target = $region53
    $region52: #{tide_forward.3} parent=1 // pred_region
      _
    $region53: #{tide_forward.3} parent=1 // pred_fallthru
      _
    %v47 = vld [vmem:[%s0] sm:$0xff]
    %v48 = vld [vmem:[%s0 + $0x8] sm:$0xff]
    %v49 = vld [vmem:[%s1] sm:$0xff]
    %v50 = vld [vmem:[%s1 + $0x8] sm:$0xff]
    %v51 = vld [vmem:[%s2] sm:$0xff]
    %v52 = vld [vmem:[%s2 + $0x8] sm:$0xff]
    %v53 = vld [vmem:[%s2 + $0x10] sm:$0xff]
    %v54 = vld [vmem:[%s2 + $0x18] sm:$0xff]
    %v55 = vld [vmem:[%s2 + $0x20] sm:$0xff]
    %v56 = vld [vmem:[%s2 + $0x28] sm:$0xff]
    %v57 = vld [vmem:[%s2 + $0x30] sm:$0xff]
    %v58 = vld [vmem:[%s2 + $0x38] sm:$0xff]
    %v59 = vld [vmem:[%s3] sm:$0x3]
    %v60 = vld [vmem:[%s4] sm:$0xff]
    %v61 = vld [vmem:[%s4 + $0x8] sm:$0xff]
    %v62 = vld [vmem:[%s4 + $0x10] sm:$0xff]
    %v63 = vld [vmem:[%s4 + $0x18] sm:$0xff]
    %v64 = vld [vmem:[%s4 + $0x20] sm:$0xff]
    %v65 = vld [vmem:[%s4 + $0x28] sm:$0xff]
    %v66 = vld [vmem:[%s4 + $0x30] sm:$0xff]
    %v67 = vld [vmem:[%s4 + $0x38] sm:$0xff]
    %v68 = vld [vmem:[%s4 + $0x40] sm:$0xff]
    %v69 = vld [vmem:[%s4 + $0x48] sm:$0xff]
    %v70 = vld [vmem:[%s4 + $0x50] sm:$0xff]
    %v71 = vld [vmem:[%s4 + $0x58] sm:$0xff]
    %v72 = vld [vmem:[%s4 + $0x60] sm:$0xff]
    %v73 = vld [vmem:[%s4 + $0x68] sm:$0xff]
    %v74 = vld [vmem:[%s4 + $0x70] sm:$0xff]
    %v75 = vld [vmem:[%s4 + $0x78] sm:$0xff]
    %v76 = vld [vmem:[%s5] sm:$0x1]
    %v78 = vlaneseq
    %v79 = vshrl.u32 %v78, 7
    %v80 = vsub.s32 0, %v79
    %v81 = vrot.slane %v59, %v80
    %v82 = vlaneseq
    %v83 = vshrl.u32 %v82, 7
    %v84 = vsub.s32 1, %v83
    %v85 = vrot.slane %v59, %v84
    %vm88 = vcmask 261120
    %v90 = vsel %vm88, %v47, 0
    %v93 = vsel %vm88, %v48, 0
    %95 = vmatprep.subr.mxu0 %v52
    %96 = vmatpush1.msra.mxu0 %v51
    %97 = vmatprep.subr.mxu0 %v54
    %98 = vmatpush1.msra.mxu0 %v53
    %99 = vmatprep.subr.mxu0 %v56
    %100 = vmatpush1.msra.mxu0 %v55
    %101 = vmatprep.subr.mxu0 %v58
    %102 = vmatpush1.msra.mxu0 %v57
    %103 = vmatprep.subr.mxu0 0.0
    %104 = vmatpush1.msra.mxu0 0.0
    %105 = vmatprep.subr.mxu0 0.0
    %106 = vmatpush1.msra.mxu0 0.0
    %107 = vmatprep.subr.mxu0 0.0
    %108 = vmatpush1.msra.mxu0 0.0
    %109 = vmatprep.subr.mxu0 0.0
    %110 = vmatpush1.msra.mxu0 0.0
    %111 = vmatprep.subr.mxu0 0.0
    %112 = vmatpush1.msra.mxu0 0.0
    %113 = vmatprep.subr.mxu0 0.0
    %114 = vmatpush1.msra.mxu0 0.0
    %115 = vmatprep.subr.mxu0 0.0
    %116 = vmatpush1.msra.mxu0 0.0
    %117 = vmatprep.subr.mxu0 0.0
    %118 = vmatpush1.msra.mxu0 0.0
    %119 = vmatprep.subr.mxu0 0.0
    %120 = vmatpush1.msra.mxu0 0.0
    %121 = vmatprep.subr.mxu0 0.0
    %122 = vmatpush1.msra.mxu0 0.0
    %123 = vmatprep.subr.mxu0 0.0
    %124 = vmatpush1.msra.mxu0 0.0
    %125 = vmatprep.subr.mxu0 0.0
    %126 = vmatpush1.msra.mxu0 0.0
    %127 = vmatprep.subr.mxu0 0.0
    %128 = vmatpush1.msra.mxu0 0.0
    %129 = vmatprep.subr.mxu0 0.0
    %130 = vmatpush1.msra.mxu0 0.0
    %131 = vmatprep.subr.mxu0 0.0
    %132 = vmatpush1.msra.mxu0 0.0
    %133 = vmatprep.subr.mxu0 0.0
    %134 = vmatpush1.msra.mxu0 0.0
    %135 = vmatprep.subr.mxu0 0.0
    %136 = vmatpush1.msra.mxu0 0.0
    %137 = vmatprep.subr.mxu0 0.0
    %138 = vmatpush1.msra.mxu0 0.0
    %139 = vmatprep.subr.mxu0 0.0
    %140 = vmatpush1.msra.mxu0 0.0
    %141 = vmatprep.subr.mxu0 0.0
    %142 = vmatpush1.msra.mxu0 0.0
    %143 = vmatprep.subr.mxu0 0.0
    %144 = vmatpush1.msra.mxu0 0.0
    %145 = vmatprep.subr.mxu0 0.0
    %146 = vmatpush1.msra.mxu0 0.0
    %147 = vmatprep.subr.mxu0 0.0
    %148 = vmatpush1.msra.mxu0 0.0
    %149 = vmatprep.subr.mxu0 0.0
    %150 = vmatpush1.msra.mxu0 0.0
    %151 = vmatprep.subr.mxu0 0.0
    %152 = vmatpush1.msra.mxu0 0.0
    %153 = vmatprep.subr.mxu0 0.0
    %154 = vmatpush1.msra.mxu0 0.0
    %155 = vmatprep.subr.mxu0 0.0
    %156 = vmatpush1.msra.mxu0 0.0
    %157 = vmatprep.subr.mxu0 0.0
    %158 = vmatpush1.msra.mxu0 0.0
    %159 = vmatprep.mubr.f32.mxu0 0.0
    %160 = vmatmul.mubr.f32.gmra.mrb[0].mxu0 %v90
    %v161 = vpop.f32.mrb[0].mxu0
    %v162 = vadd.f32 %v81, %v161
    %v163 = vpop.f32.mrb[0].mxu0
    %v164 = vadd.f32 %v85, %v163
    %165 = vmatprep.mubr.f32.mxu0 0.0
    %166 = vmatmul.mubr.f32.gmra.mrb[0].mxu0 %v93
    %v167 = vpop.f32.mrb[0].mxu0
    %v168 = vadd.f32 %v81, %v167
    %v169 = vpop.f32.mrb[0].mxu0
    %v170 = vadd.f32 %v85, %v169
    %171 = vdwg.mxu0
    %v172 = vmax.f32 %v162, 0.0
    %v173 = vmax.f32 %v168, 0.0
    %v175 = vlaneseq
    %v176 = vshrl.u32 %v175, 7
    %v177 = vsub.s32 0, %v176
    %v178 = vrot.slane %v76, %v177
    %180 = vmatprep.subr.mxu0 0.0
    %181 = vmatpush1.msra.mxu0 %v60
    %182 = vmatprep.subr.mxu0 0.0
    %183 = vmatpush1.msra.mxu0 %v61
    %184 = vmatprep.subr.mxu0 0.0
    %185 = vmatpush1.msra.mxu0 %v62
    %186 = vmatprep.subr.mxu0 0.0
    %187 = vmatpush1.msra.mxu0 %v63
    %188 = vmatprep.subr.mxu0 0.0
    %189 = vmatpush1.msra.mxu0 %v64
    %190 = vmatprep.subr.mxu0 0.0
    %191 = vmatpush1.msra.mxu0 %v65
    %192 = vmatprep.subr.mxu0 0.0
    %193 = vmatpush1.msra.mxu0 %v66
    %194 = vmatprep.subr.mxu0 0.0
    %195 = vmatpush1.msra.mxu0 %v67
    %196 = vmatprep.subr.mxu0 0.0
    %197 = vmatpush1.msra.mxu0 %v68
    %198 = vmatprep.subr.mxu0 0.0
    %199 = vmatpush1.msra.mxu0 %v69
    %200 = vmatprep.subr.mxu0 0.0
    %201 = vmatpush1.msra.mxu0 %v70
    %202 = vmatprep.subr.mxu0 0.0
    %203 = vmatpush1.msra.mxu0 %v71
    %204 = vmatprep.subr.mxu0 0.0
    %205 = vmatpush1.msra.mxu0 %v72
    %206 = vmatprep.subr.mxu0 0.0
    %207 = vmatpush1.msra.mxu0 %v73
    %208 = vmatprep.subr.mxu0 0.0
    %209 = vmatpush1.msra.mxu0 %v74
    %210 = vmatprep.subr.mxu0 0.0
    %211 = vmatpush1.msra.mxu0 %v75
    %212 = vmatprep.subr.mxu0 0.0
    %213 = vmatpush1.msra.mxu0 0.0
    %214 = vmatprep.subr.mxu0 0.0
    %215 = vmatpush1.msra.mxu0 0.0
    %216 = vmatprep.subr.mxu0 0.0
    %217 = vmatpush1.msra.mxu0 0.0
    %218 = vmatprep.subr.mxu0 0.0
    %219 = vmatpush1.msra.mxu0 0.0
    %220 = vmatprep.subr.mxu0 0.0
    %221 = vmatpush1.msra.mxu0 0.0
    %222 = vmatprep.subr.mxu0 0.0
    %223 = vmatpush1.msra.mxu0 0.0
    %224 = vmatprep.subr.mxu0 0.0
    %225 = vmatpush1.msra.mxu0 0.0
    %226 = vmatprep.subr.mxu0 0.0
    %227 = vmatpush1.msra.mxu0 0.0
    %228 = vmatprep.subr.mxu0 0.0
    %229 = vmatpush1.msra.mxu0 0.0
    %230 = vmatprep.subr.mxu0 0.0
    %231 = vmatpush1.msra.mxu0 0.0
    %232 = vmatprep.subr.mxu0 0.0
    %233 = vmatpush1.msra.mxu0 0.0
    %234 = vmatprep.subr.mxu0 0.0
    %235 = vmatpush1.msra.mxu0 0.0
    %236 = vmatprep.subr.mxu0 0.0
    %237 = vmatpush1.msra.mxu0 0.0
    %238 = vmatprep.subr.mxu0 0.0
    %239 = vmatpush1.msra.mxu0 0.0
    %240 = vmatprep.subr.mxu0 0.0
    %241 = vmatpush1.msra.mxu0 0.0
    %242 = vmatprep.subr.mxu0 0.0
    %243 = vmatpush1.msra.mxu0 0.0
    %244 = vmatprep.mubr.f32.mxu0 0.0
    %245 = vmatmul.mubr.f32.gmra.mrb[0].mxu0 %v172
    %v246 = vpop.f32.mrb[0].mxu0
    %v247 = vadd.f32 %v178, %v246
    %v248 = vpop.f32.mrb[0].mxu0
    %249 = vmatprep.mubr.f32.mxu0 0.0
    %250 = vmatmul.mubr.f32.gmra.mrb[0].mxu0 %v173
    %v251 = vpop.f32.mrb[0].mxu0
    %v252 = vadd.f32 %v178, %v251
    %v253 = vpop.f32.mrb[0].mxu0
    %254 = vdwg.mxu0
    %v255 = vadd.f32 %v247, %v164
    %v256 = vadd.f32 %v252, %v170
    %v257 = vld [vmem:[%s7] sm:$0xff]
    %v258 = vld [vmem:[%s7 + $0x8] sm:$0xff]
    %v259 = vld [vmem:[%s7 + $0x10] sm:$0xff]
    %v260 = vld [vmem:[%s7 + $0x18] sm:$0xff]
    %v261 = vld [vmem:[%s7 + $0x20] sm:$0xff]
    %v262 = vld [vmem:[%s7 + $0x28] sm:$0xff]
    %v263 = vld [vmem:[%s7 + $0x30] sm:$0xff]
    %v264 = vld [vmem:[%s7 + $0x38] sm:$0xff]
    %v265 = vld [vmem:[%s6] sm:$0xf]
    %267 = vset.pattern.permute.xlu0 0
    %268 = vperm.xlu0 %267, %v255
    %v269 = vpop.permute.xlu0 %268
    %272 = vset.pattern.permute.xlu0 0
    %273 = vperm.xlu0 %272, %v256
    %v274 = vpop.permute.xlu0 %273
    %v277 = vlaneseq
    %v278 = vshrl.u32 %v277, 7
    %v279 = vsub.s32 0, %v278
    %v280 = vrot.slane %v265, %v279
    %v281 = vlaneseq
    %v282 = vshrl.u32 %v281, 7
    %v283 = vsub.s32 2, %v282
    %v284 = vrot.slane %v265, %v283
    %v287 = vlaneseq
    %v288 = vshrl.u32 %v287, 7
    %v289 = vsub.s32 0, %v288
    %v290 = vrot.slane %v280, %v289
    %v291 = vlaneseq
    %v292 = vshrl.u32 %v291, 7
    %v293 = vsub.s32 0, %v292
    %v294 = vrot.slane %v284, %v293
    %v295 = vmul.f32 %v269, %v290
    %v296 = vmul.f32 %v269, %v294
    %v297 = vmul.f32 %v274, %v290
    %v298 = vmul.f32 %v274, %v294
    %v300 = vsel %vm88, %v49, 0
    %v303 = vsel %vm88, %v50, 0
    %305 = vmatprep.subr.mxu0 %v258
    %306 = vmatpush1.msra.mxu0 %v257
    %307 = vmatprep.subr.mxu0 %v260
    %308 = vmatpush1.msra.mxu0 %v259
    %309 = vmatprep.subr.mxu0 %v262
    %310 = vmatpush1.msra.mxu0 %v261
    %311 = vmatprep.subr.mxu0 %v264
    %312 = vmatpush1.msra.mxu0 %v263
    %313 = vmatprep.subr.mxu0 0.0
    %314 = vmatpush1.msra.mxu0 0.0
    %315 = vmatprep.subr.mxu0 0.0
    %316 = vmatpush1.msra.mxu0 0.0
    %317 = vmatprep.subr.mxu0 0.0
    %318 = vmatpush1.msra.mxu0 0.0
    %319 = vmatprep.subr.mxu0 0.0
    %320 = vmatpush1.msra.mxu0 0.0
    %321 = vmatprep.subr.mxu0 0.0
    %322 = vmatpush1.msra.mxu0 0.0
    %323 = vmatprep.subr.mxu0 0.0
    %324 = vmatpush1.msra.mxu0 0.0
    %325 = vmatprep.subr.mxu0 0.0
    %326 = vmatpush1.msra.mxu0 0.0
    %327 = vmatprep.subr.mxu0 0.0
    %328 = vmatpush1.msra.mxu0 0.0
    %329 = vmatprep.subr.mxu0 0.0
    %330 = vmatpush1.msra.mxu0 0.0
    %331 = vmatprep.subr.mxu0 0.0
    %332 = vmatpush1.msra.mxu0 0.0
    %333 = vmatprep.subr.mxu0 0.0
    %334 = vmatpush1.msra.mxu0 0.0
    %335 = vmatprep.subr.mxu0 0.0
    %336 = vmatpush1.msra.mxu0 0.0
    %337 = vmatprep.subr.mxu0 0.0
    %338 = vmatpush1.msra.mxu0 0.0
    %339 = vmatprep.subr.mxu0 0.0
    %340 = vmatpush1.msra.mxu0 0.0
    %341 = vmatprep.subr.mxu0 0.0
    %342 = vmatpush1.msra.mxu0 0.0
    %343 = vmatprep.subr.mxu0 0.0
    %344 = vmatpush1.msra.mxu0 0.0
    %345 = vmatprep.subr.mxu0 0.0
    %346 = vmatpush1.msra.mxu0 0.0
    %347 = vmatprep.subr.mxu0 0.0
    %348 = vmatpush1.msra.mxu0 0.0
    %349 = vmatprep.subr.mxu0 0.0
    %350 = vmatpush1.msra.mxu0 0.0
    %351 = vmatprep.subr.mxu0 0.0
    %352 = vmatpush1.msra.mxu0 0.0
    %353 = vmatprep.subr.mxu0 0.0
    %354 = vmatpush1.msra.mxu0 0.0
    %355 = vmatprep.subr.mxu0 0.0
    %356 = vmatpush1.msra.mxu0 0.0
    %357 = vmatprep.subr.mxu0 0.0
    %358 = vmatpush1.msra.mxu0 0.0
    %359 = vmatprep.subr.mxu0 0.0
    %360 = vmatpush1.msra.mxu0 0.0
    %361 = vmatprep.subr.mxu0 0.0
    %362 = vmatpush1.msra.mxu0 0.0
    %363 = vmatprep.subr.mxu0 0.0
    %364 = vmatpush1.msra.mxu0 0.0
    %365 = vmatprep.subr.mxu0 0.0
    %366 = vmatpush1.msra.mxu0 0.0
    %367 = vmatprep.subr.mxu0 0.0
    %368 = vmatpush1.msra.mxu0 0.0
    %369 = vmatprep.mubr.f32.mxu0 0.0
    %370 = vmatmul.mubr.f32.gmra.mrb[0].mxu0 %v300
    %v371 = vpop.f32.mrb[0].mxu0
    %v372 = vadd.f32 %v295, %v371
    %v373 = vpop.f32.mrb[0].mxu0
    %v374 = vadd.f32 %v296, %v373
    %375 = vmatprep.mubr.f32.mxu0 0.0
    %376 = vmatmul.mubr.f32.gmra.mrb[0].mxu0 %v303
    %v377 = vpop.f32.mrb[0].mxu0
    %v378 = vadd.f32 %v297, %v377
    %v379 = vpop.f32.mrb[0].mxu0
    %v380 = vadd.f32 %v298, %v379
    %381 = vdwg.mxu0
    %382 = vset.pattern.permute.xlu0 1
    %383 = vperm.xlu0 %382, %v255
    %v384 = vpop.permute.xlu0 %383
    %386 = vset.pattern.permute.xlu0 1
    %387 = vperm.xlu0 %386, %v256
    %v388 = vpop.permute.xlu0 %387
    %v390 = vlaneseq
    %v391 = vshrl.u32 %v390, 7
    %v392 = vsub.s32 1, %v391
    %v393 = vrot.slane %v265, %v392
    %v394 = vlaneseq
    %v395 = vshrl.u32 %v394, 7
    %v396 = vsub.s32 3, %v395
    %v397 = vrot.slane %v265, %v396
    %v400 = vlaneseq
    %v401 = vshrl.u32 %v400, 7
    %v402 = vsub.s32 1, %v401
    %v403 = vrot.slane %v393, %v402
    %v404 = vlaneseq
    %v405 = vshrl.u32 %v404, 7
    %v406 = vsub.s32 1, %v405
    %v407 = vrot.slane %v397, %v406
    %v408 = vmul.f32 %v384, %v403
    %v409 = vmul.f32 %v384, %v407
    %v410 = vmul.f32 %v388, %v403
    %v411 = vmul.f32 %v388, %v407
    %v412 = vadd.f32 %v372, %v408
    %v413 = vadd.f32 %v374, %v409
    %v414 = vadd.f32 %v378, %v410
    %v415 = vadd.f32 %v380, %v411
    %v416 = vld [vmem:[%s8] sm:$0x3]
    %v418 = vlaneseq
    %v419 = vshrl.u32 %v418, 7
    %v420 = vsub.s32 0, %v419
    %v421 = vrot.slane %v416, %v420
    %v422 = vlaneseq
    %v423 = vshrl.u32 %v422, 7
    %v424 = vsub.s32 1, %v423
    %v425 = vrot.slane %v416, %v424
    %v428 = vadd.f32 %v412, %v421
    %v429 = vadd.f32 %v413, %v425
    %v430 = vadd.f32 %v414, %v421
    %v431 = vadd.f32 %v415, %v425
    %v432 = vmax.f32 %v428, 0.0
    %v433 = vmax.f32 %v430, 0.0
    %v434 = vld [vmem:[%s9] sm:$0xff]
    %v435 = vld [vmem:[%s9 + $0x8] sm:$0xff]
    %v436 = vld [vmem:[%s9 + $0x10] sm:$0xff]
    %v437 = vld [vmem:[%s9 + $0x18] sm:$0xff]
    %v438 = vld [vmem:[%s9 + $0x20] sm:$0xff]
    %v439 = vld [vmem:[%s9 + $0x28] sm:$0xff]
    %v440 = vld [vmem:[%s9 + $0x30] sm:$0xff]
    %v441 = vld [vmem:[%s9 + $0x38] sm:$0xff]
    %v442 = vld [vmem:[%s9 + $0x40] sm:$0xff]
    %v443 = vld [vmem:[%s9 + $0x48] sm:$0xff]
    %v444 = vld [vmem:[%s9 + $0x50] sm:$0xff]
    %v445 = vld [vmem:[%s9 + $0x58] sm:$0xff]
    %v446 = vld [vmem:[%s9 + $0x60] sm:$0xff]
    %v447 = vld [vmem:[%s9 + $0x68] sm:$0xff]
    %v448 = vld [vmem:[%s9 + $0x70] sm:$0xff]
    %v449 = vld [vmem:[%s9 + $0x78] sm:$0xff]
    %v450 = vld [vmem:[#allocation2] sm:$0x1]
    %v452 = vlaneseq
    %v453 = vshrl.u32 %v452, 7
    %v454 = vsub.s32 0, %v453
    %v455 = vrot.slane %v450, %v454
    %457 = vmatprep.subr.mxu0 0.0
    %458 = vmatpush1.msra.mxu0 %v434
    %459 = vmatprep.subr.mxu0 0.0
    %460 = vmatpush1.msra.mxu0 %v435
    %461 = vmatprep.subr.mxu0 0.0
    %462 = vmatpush1.msra.mxu0 %v436
    %463 = vmatprep.subr.mxu0 0.0
    %464 = vmatpush1.msra.mxu0 %v437
    %465 = vmatprep.subr.mxu0 0.0
    %466 = vmatpush1.msra.mxu0 %v438
    %467 = vmatprep.subr.mxu0 0.0
    %468 = vmatpush1.msra.mxu0 %v439
    %469 = vmatprep.subr.mxu0 0.0
    %470 = vmatpush1.msra.mxu0 %v440
    %471 = vmatprep.subr.mxu0 0.0
    %472 = vmatpush1.msra.mxu0 %v441
    %473 = vmatprep.subr.mxu0 0.0
    %474 = vmatpush1.msra.mxu0 %v442
    %475 = vmatprep.subr.mxu0 0.0
    %476 = vmatpush1.msra.mxu0 %v443
    %477 = vmatprep.subr.mxu0 0.0
    %478 = vmatpush1.msra.mxu0 %v444
    %479 = vmatprep.subr.mxu0 0.0
    %480 = vmatpush1.msra.mxu0 %v445
    %481 = vmatprep.subr.mxu0 0.0
    %482 = vmatpush1.msra.mxu0 %v446
    %483 = vmatprep.subr.mxu0 0.0
    %484 = vmatpush1.msra.mxu0 %v447
    %485 = vmatprep.subr.mxu0 0.0
    %486 = vmatpush1.msra.mxu0 %v448
    %487 = vmatprep.subr.mxu0 0.0
    %488 = vmatpush1.msra.mxu0 %v449
    %489 = vmatprep.subr.mxu0 0.0
    %490 = vmatpush1.msra.mxu0 0.0
    %491 = vmatprep.subr.mxu0 0.0
    %492 = vmatpush1.msra.mxu0 0.0
    %493 = vmatprep.subr.mxu0 0.0
    %494 = vmatpush1.msra.mxu0 0.0
    %495 = vmatprep.subr.mxu0 0.0
    %496 = vmatpush1.msra.mxu0 0.0
    %497 = vmatprep.subr.mxu0 0.0
    %498 = vmatpush1.msra.mxu0 0.0
    %499 = vmatprep.subr.mxu0 0.0
    %500 = vmatpush1.msra.mxu0 0.0
    %501 = vmatprep.subr.mxu0 0.0
    %502 = vmatpush1.msra.mxu0 0.0
    %503 = vmatprep.subr.mxu0 0.0
    %504 = vmatpush1.msra.mxu0 0.0
    %505 = vmatprep.subr.mxu0 0.0
    %506 = vmatpush1.msra.mxu0 0.0
    %507 = vmatprep.subr.mxu0 0.0
    %508 = vmatpush1.msra.mxu0 0.0
    %509 = vmatprep.subr.mxu0 0.0
    %510 = vmatpush1.msra.mxu0 0.0
    %511 = vmatprep.subr.mxu0 0.0
    %512 = vmatpush1.msra.mxu0 0.0
    %513 = vmatprep.subr.mxu0 0.0
    %514 = vmatpush1.msra.mxu0 0.0
    %515 = vmatprep.subr.mxu0 0.0
    %516 = vmatpush1.msra.mxu0 0.0
    %517 = vmatprep.subr.mxu0 0.0
    %518 = vmatpush1.msra.mxu0 0.0
    %519 = vmatprep.subr.mxu0 0.0
    %520 = vmatpush1.msra.mxu0 0.0
    %521 = vmatprep.mubr.f32.mxu0 0.0
    %522 = vmatmul.mubr.f32.gmra.mrb[0].mxu0 %v432
    %v523 = vpop.f32.mrb[0].mxu0
    %v524 = vadd.f32 %v455, %v523
    %v525 = vpop.f32.mrb[0].mxu0
    %526 = vmatprep.mubr.f32.mxu0 0.0
    %527 = vmatmul.mubr.f32.gmra.mrb[0].mxu0 %v433
    %v528 = vpop.f32.mrb[0].mxu0
    %v529 = vadd.f32 %v455, %v528
    %v530 = vpop.f32.mrb[0].mxu0
    %531 = vdwg.mxu0
    %v532 = vadd.f32 %v524, %v429
    %v533 = vadd.f32 %v529, %v431
    %v534 = vld [vmem:[%s11] sm:$0xff]
    %v535 = vld [vmem:[%s12] sm:$0x1]
    %v537 = vlaneseq
    %v538 = vshrl.u32 %v537, 7
    %v539 = vsub.s32 0, %v538
    %v540 = vrot.slane %v535, %v539
    %544 = vset.pattern.permute.xlu0 0
    %545 = vperm.xlu0 %544, %v532
    %v546 = vpop.permute.xlu0 %545
    %547 = vset.pattern.permute.xlu0 0
    %548 = vperm.xlu0 %547, %v533
    %v549 = vpop.permute.xlu0 %548
    %v550 = vlaneseq
    %v551 = vand.u32 %v550, 127
    %v552 = vlaneseq
    %v553 = vshrl.u32 %v552, 7
    %v554 = vsub.s32 %v551, %v553
    %v555 = vrot.slane %v546, %v554
    %v556 = vlaneseq
    %v557 = vshrl.u32 %v556, 7
    %v558 = vsub.s32 %v551, %v557
    %v559 = vrot.slane %v549, %v558
    %vm560 = vcmask 1041409
    %v561 = vsel %vm560, %v559, %v555
    %vm562 = vcmask 64512
    %v563 = vsel %vm562, %v561, 0
    %565 = vmatprep.subr.mxu0 0.0
    %566 = vmatpush1.msra.mxu0 %v534
    %567 = vmatprep.subr.mxu0 0.0
    %568 = vmatpush1.msra.mxu0 0.0
    %569 = vmatprep.subr.mxu0 0.0
    %570 = vmatpush1.msra.mxu0 0.0
    %571 = vmatprep.subr.mxu0 0.0
    %572 = vmatpush1.msra.mxu0 0.0
    %573 = vmatprep.subr.mxu0 0.0
    %574 = vmatpush1.msra.mxu0 0.0
    %575 = vmatprep.subr.mxu0 0.0
    %576 = vmatpush1.msra.mxu0 0.0
    %577 = vmatprep.subr.mxu0 0.0
    %578 = vmatpush1.msra.mxu0 0.0
    %579 = vmatprep.subr.mxu0 0.0
    %580 = vmatpush1.msra.mxu0 0.0
    %581 = vmatprep.subr.mxu0 0.0
    %582 = vmatpush1.msra.mxu0 0.0
    %583 = vmatprep.subr.mxu0 0.0
    %584 = vmatpush1.msra.mxu0 0.0
    %585 = vmatprep.subr.mxu0 0.0
    %586 = vmatpush1.msra.mxu0 0.0
    %587 = vmatprep.subr.mxu0 0.0
    %588 = vmatpush1.msra.mxu0 0.0
    %589 = vmatprep.subr.mxu0 0.0
    %590 = vmatpush1.msra.mxu0 0.0
    %591 = vmatprep.subr.mxu0 0.0
    %592 = vmatpush1.msra.mxu0 0.0
    %593 = vmatprep.subr.mxu0 0.0
    %594 = vmatpush1.msra.mxu0 0.0
    %595 = vmatprep.subr.mxu0 0.0
    %596 = vmatpush1.msra.mxu0 0.0
    %597 = vmatprep.subr.mxu0 0.0
    %598 = vmatpush1.msra.mxu0 0.0
    %599 = vmatprep.subr.mxu0 0.0
    %600 = vmatpush1.msra.mxu0 0.0
    %601 = vmatprep.subr.mxu0 0.0
    %602 = vmatpush1.msra.mxu0 0.0
    %603 = vmatprep.subr.mxu0 0.0
    %604 = vmatpush1.msra.mxu0 0.0
    %605 = vmatprep.subr.mxu0 0.0
    %606 = vmatpush1.msra.mxu0 0.0
    %607 = vmatprep.subr.mxu0 0.0
    %608 = vmatpush1.msra.mxu0 0.0
    %609 = vmatprep.subr.mxu0 0.0
    %610 = vmatpush1.msra.mxu0 0.0
    %611 = vmatprep.subr.mxu0 0.0
    %612 = vmatpush1.msra.mxu0 0.0
    %613 = vmatprep.subr.mxu0 0.0
    %614 = vmatpush1.msra.mxu0 0.0
    %615 = vmatprep.subr.mxu0 0.0
    %616 = vmatpush1.msra.mxu0 0.0
    %617 = vmatprep.subr.mxu0 0.0
    %618 = vmatpush1.msra.mxu0 0.0
    %619 = vmatprep.subr.mxu0 0.0
    %620 = vmatpush1.msra.mxu0 0.0
    %621 = vmatprep.subr.mxu0 0.0
    %622 = vmatpush1.msra.mxu0 0.0
    %623 = vmatprep.subr.mxu0 0.0
    %624 = vmatpush1.msra.mxu0 0.0
    %625 = vmatprep.subr.mxu0 0.0
    %626 = vmatpush1.msra.mxu0 0.0
    %627 = vmatprep.subr.mxu0 0.0
    %628 = vmatpush1.msra.mxu0 0.0
    %629 = vmatprep.mubr.f32.mxu0 0.0
    %630 = vmatmul.mubr.f32.gmra.mrb[0].mxu0 %v563
    %v631 = vpop.f32.mrb[0].mxu0
    %v632 = vadd.f32 %v540, %v631
    %v633 = vpop.f32.mrb[0].mxu0
    %634 = vdwg.mxu0
    %vm635 = vcmask 58368
    %636 = vst.msk [vmem:[#allocation3] sm:$0x3] %vm635, %v632
    // Predicated region
    $region54: #{tide_forward.3} parent=1 // pred_check
      _
    $region55: #{tide_forward.3} parent=1 // pred_check_branch
      %638 = sbr.rel (0) target = $region57
    $region56: #{tide_forward.3} parent=1 // pred_region
      %s640 = ssub.s32 32, 32
      %641 = vsyncadd [#allocation4], %s640
      %s643 = sshll.u32 [#allocation3], 4
      %s644 = int_to_ptr.vmem [resolvable:$true] %s643
      %646 = dma.vmem_to_hbm [thread:$0]  %s644, 32, %s13, [#allocation4]
    $region57: #{tide_forward.3} parent=1 // pred_fallthru
      _
    // Predicated region
    $region58: #{tide_forward.3} parent=1 // pred_check
      _
    $region59: #{tide_forward.3} parent=1 // pred_check_branch
      %648 = sbr.rel (0) target = $region61
    $region60: #{tide_forward.3} parent=1 // pred_region
      %649 = dma.done [#allocation4], 32
    $region61: #{tide_forward.3} parent=1 // pred_fallthru
      _
    %650 = vsyncpa [#allocation4], 1

</llo_original>
